<compile_context>
chip_gen: v7x
topology: tpu7x:2x2x1
jax: 0.10.0
libtpu: 0.0.40
codegen_flags: <defaults>
</compile_context>

<pallas_src>
import numpy as np
import jax
import jax.numpy as jnp
from jax.experimental import pallas as pl
from jax.experimental.pallas import tpu as pltpu


def _round_up(a, b):
    return ((a + b - 1) // b) * b


def _abs2_kernel(p_ref, x_ref, o_ref):
    # p_ref: (2*tile_t, tile_t) static pairing matrix, resident in VMEM.
    # x_ref: (tile_n, 2*tile_t) interleaved real/imag block.
    # o_ref: (tile_n, tile_t) |z|^2 block (lane-dense, tile_t % 128 == 0).
    y = x_ref[...].astype(jnp.float32)
    y = y * y                                        # r^2, i^2 interleaved (VPU)
    o_ref[...] = jnp.dot(                            # pair-sum + compaction (MXU)
        y, p_ref[...],
        precision=jax.lax.Precision.HIGHEST,
        preferred_element_type=jnp.float32,
    ).astype(o_ref.dtype)


def complex_abs_power(x, *, tile_n=256, tile_t=128):
    """real**2 + imag**2 over the trailing (real, imag) axis of size 2."""
    shape = x.shape
    assert shape[-1] == 2, "last dim must hold (real, imag)"
    out_shape = shape[:-1]

    if len(out_shape) >= 2:
        T = int(out_shape[-1])
        N = int(np.prod(out_shape[:-1]))
    else:
        T = int(out_shape[0]) if len(out_shape) == 1 else 1
        N = 1

    # Free view: rows x interleaved (real, imag) lanes.
    x2 = x.reshape(N, 2 * T)

    # Tile sizes: rows a multiple of 8 sublanes, time a multiple of 128 lanes.
    tile_n = min(tile_n, _round_up(N, 8))
    tile_t = min(tile_t, _round_up(T, 128))
    Np = _round_up(N, tile_n)
    Tp = _round_up(T, tile_t)
    if (Np, Tp) != (N, T):
        # Zero-pad to tile multiples (keeps VMEM bounded; pad squares to 0).
        x2 = jnp.pad(x2, ((0, Np - N), (0, 2 * (Tp - T))))

    # Static pairing matrix: out[:, t] = y[:, 2t] + y[:, 2t + 1].
    p = np.zeros((2 * tile_t, tile_t), np.float32)
    idx = np.arange(tile_t)
    p[2 * idx, idx] = 1.0
    p[2 * idx + 1, idx] = 1.0
    p = jnp.asarray(p)

    grid = (Np // tile_n, Tp // tile_t)

    out = pl.pallas_call(
        _abs2_kernel,
        out_shape=jax.ShapeDtypeStruct((Np, Tp), x.dtype),
        grid_spec=pl.GridSpec(
            grid=grid,
            in_specs=[
                # Pairing matrix: same block every step -> DMA'd once, resident.
                pl.BlockSpec((2 * tile_t, tile_t), lambda i, j: (0, 0)),
                # Input row/time tile.
                pl.BlockSpec((tile_n, 2 * tile_t), lambda i, j: (i, j)),
            ],
            out_specs=pl.BlockSpec((tile_n, tile_t), lambda i, j: (i, j)),
        ),
        compiler_params=pltpu.CompilerParams(
            dimension_semantics=("parallel", "parallel"),
        ),
    )(p, x2)

    return out[:N, :T].reshape(out_shape)


if __name__ == "__main__":
    key = jax.random.PRNGKey(0)
    B, C, F, T = 2, 4, 16, 256          # trailing dim of 2 = (real, imag)
    x = jax.random.normal(key, (B, C, F, T, 2), dtype=jnp.float32)

    out = complex_abs_power(x)
    out = jax.block_until_ready(out)

    # Pure-JAX reference identical to the PyTorch forward.
    real = x[..., 0]
    imag = x[..., 1]
    ref = real * real + imag * imag

    assert out.shape == (B, C, F, T), out.shape
    np.testing.assert_allclose(np.asarray(out), np.asarray(ref),
                               rtol=1e-5, atol=1e-5)
    print("KERNEL_OK")
</pallas_src>

<mosaic_0001>
module attributes {stable_mosaic.version = 11 : i64} {
  func.func @_abs2_kernel(%arg0: i32, %arg1: i32, %arg2: memref<256x128xf32, #tpu.memory_space<vmem>>, %arg3: memref<128x256xf32, #tpu.memory_space<vmem>>, %arg4: memref<128x128xf32, #tpu.memory_space<vmem>>) attributes {dimension_semantics = [#tpu.dimension_semantics<parallel>, #tpu.dimension_semantics<parallel>], iteration_bounds = array<i64: 1, 2>, scalar_prefetch = 0 : i64, scratch_operands = 0 : i64, tpu.core_type = #tpu.core_type<tc>, window_params = [{pipeline_mode = #tpu.pipeline_mode<synchronous>, transform_indices = @transform_0, window_bounds = array<i64: 256, 128>}, {transform_indices = @transform_1, window_bounds = array<i64: 128, 256>}, {transform_indices = @transform_2, window_bounds = array<i64: 128, 128>}]} {
    %c0 = arith.constant 0 : index
    %c0_0 = arith.constant 0 : index
    %0 = vector.load %arg3[%c0, %c0_0] : memref<128x256xf32, #tpu.memory_space<vmem>>, vector<128x256xf32>
    %1 = arith.mulf %0, %0 : vector<128x256xf32>
    %c0_1 = arith.constant 0 : index
    %c0_2 = arith.constant 0 : index
    %2 = vector.load %arg2[%c0_1, %c0_2] : memref<256x128xf32, #tpu.memory_space<vmem>>, vector<256x128xf32>
    %cst = arith.constant dense<0.000000e+00> : vector<128x128xf32>
    %3 = tpu.matmul %1, %2, %cst {dimension_numbers = #tpu.dot_dimension_numbers<[1], [0], [0], [1], [0, 0, 1, 1], [], []>, precision = #tpu.contract_precision<fp32>} : vector<128x256xf32>, vector<256x128xf32>, vector<128x128xf32> -> vector<128x128xf32>
    %c0_3 = arith.constant 0 : index
    %c0_4 = arith.constant 0 : index
    %4 = vector.load %arg4[%c0_3, %c0_4] : memref<128x128xf32, #tpu.memory_space<vmem>>, vector<128x128xf32>
    tpu.vector_store %arg4[%c0_3, %c0_4], %3 {strides = array<i32>} : memref<128x128xf32, #tpu.memory_space<vmem>>, vector<128x128xf32>,
    return
  }
  func.func @transform_0(%arg0: i32, %arg1: i32) -> (i32, i32) {
    %c0_i32 = arith.constant 0 : i32
    %c0_i32_0 = arith.constant 0 : i32
    %c0_i32_1 = arith.constant 0 : i32
    return %c0_i32, %c0_i32_0 : i32, i32
  }
  func.func @transform_1(%arg0: i32, %arg1: i32) -> (i32, i32) {
    %c0_i32 = arith.constant 0 : i32
    return %arg0, %arg1 : i32, i32
  }
  func.func @transform_2(%arg0: i32, %arg1: i32) -> (i32, i32) {
    %c0_i32 = arith.constant 0 : i32
    return %arg0, %arg1 : i32, i32
  }
}

</mosaic_0001>

<llo_original>
// kernel: tpu_custom_call.1
$region0: #{tpu_custom_call.1}
  #allocation0 [shape = 'u32[]', space=smem, size = 0x4, offset = 0x4, fixed_abs, tag = 'smem constant byte address 0x4 - core index']
  #allocation1 [shape = 'u32[144,128]{1,0:T(1,128)}', space=vmem, size = 0x12000, scoped, tag = 'internal scratch']
  %s0 = inlined_call_operand.hbm [shape: f32[256,128], index: 0, kind: input, shape index: {}]
  %s1 = inlined_call_operand.hbm [shape: f32[128,512], index: 1, kind: input, shape index: {}]
  %s2 = inlined_call_operand.hbm [shape: f32[128,256], index: 2, kind: output, shape index: {}]
  %s3 = sld [smem:[#allocation0]]
  $region49: #{tpu_custom_call.1} parent=0
    _
  %s5 = ssub.s32 1, %s3
  %s6 = scalar_select 0, %s5, %s3
  $region1: #{tpu_custom_call.1} parent=0
    #allocation2 [shape = 'u8[131072]{0}', space=vmem, size = 0x20000, scoped, tag = 'input window, operand 0, single buffered']
    #allocation3 [shape = 's32[2]{0}', space=sflag, size = 0x8, scoped, tag = 'scoped memory for tpu_custom_call.1']
    #allocation4 [shape = 's32[2]{0}', space=sflag, size = 0x8, scoped, tag = 'scoped memory for tpu_custom_call.1']
    #allocation5 [shape = 'u8[262144]{0}', space=vmem, size = 0x40000, scoped, tag = 'input window, operand 1']
    #allocation6 [shape = 's32[2]{0}', space=sflag, size = 0x8, scoped, tag = 'scoped memory for tpu_custom_call.1']
    #allocation7 [shape = 'u8[131072]{0}', space=vmem, size = 0x20000, scoped, tag = 'output window, operand 0']
    %7 = vsyncpa [#allocation3], 0
    %8 = vsyncpa [#allocation6], 0
    %s9 = scalar_lea.sflag [#allocation6], 1
    %10 = vsyncpa %s9, 0
    %11 = vsyncpa [#allocation4], 0
    %s12 = scalar_lea.sflag [#allocation4], 1
    %13 = vsyncpa %s12, 0
    loop: start=0, step=1, limit=4
    $region2: #{tpu_custom_call.1} parent=1 // loop_pre_header
      _
    $region3: #{tpu_custom_call.1} parent=1 // loop_header
      %s15 = sphi 0, %s19
      %p16 = scmp.ge.s32.totalorder %s15, 4
      %s22 = sphi 0, %s34
      %s23 = sphi 0, %s30
      %s24 = sphi 0, %s22
      %s25 = sphi 0, %s23
      %s26 = sphi 0, %s24
      %s27 = sphi 0, %s25
      %s35 = sphi 0, %s35
      %s37 = sphi 0, %s35
      %s38 = sphi 0, %s37
      %s52 = sphi 0, %s38
      %s60 = sphi 0, %s62
      %s63 = sphi 0, %s60
      %s64 = sphi 0, %s63
      %s80 = sphi 0, %s64
      %s88 = sphi 0, %s90
      %s91 = sphi 0, %s88
      %s92 = sphi 0, %s91
      %s108 = sphi 0, %s92
    $region4: #{tpu_custom_call.1} parent=1 // loop_header_branch
      %18 = sbr.rel (%p16) target = $region8
    $region5: #{tpu_custom_call.1} parent=1 // loop_body
      %s20 = ssub.s32 %s15, 1
      %s21 = ssub.s32 %s15, 2
      %s28 = sadd.s32 1, %s23
      %p29 = scmp.ge.s32.totalorder %s28, 2
      %s30 = scalar_select %p29, 0, %s28
      %s31 = sadd.s32 1, %s22
      %s32 = scalar_select %p29, %s31, %s22
      %p33 = scmp.ge.s32.totalorder %s32, 1
      %s34 = scalar_select %p33, 0, %s32
      %s36 = sadd.s32 %s35, 1
      %p39 = scmp.eq.s32.totalorder %s15, 1
      %p40 = scmp.ne.s32.totalorder %s35, %s37
      %p41 = scmp.eq.s32.totalorder %s15, 0
      %p42 = por %p40, %p41
      %p43 = scmp.ne.s32.totalorder %s35, %s37
      %p44 = scmp.eq.s32.totalorder %s20, 1
      %p45 = por %p43, %p44
      %p46 = scmp.ne.s32.totalorder %s37, %s38
      %p47 = scmp.eq.s32.totalorder %s20, 0
      %p48 = por %p46, %p47
      %p49 = scmp.ne.s32.totalorder %s37, %s38
      %p50 = scmp.eq.s32.totalorder %s21, 1
      %p51 = por %p49, %p50
      %p53 = scmp.ne.s32.totalorder %s38, %s52
      %p54 = scmp.eq.s32.totalorder %s21, 0
      %p55 = por %p53, %p54
      %s56 = ssub.s32 %s22, %s34
      %s57 = ssub.s32 %s23, %s30
      %s58 = sor.u32 %s56, %s57
      %p59 = scmp.eq.s32.totalorder %s58, 0
      %s61 = sadd.s32 %s60, 1
      %s62 = scalar_select %p59, %s60, %s61
      %p65 = pneg %p59
      %p66 = scmp.eq.s32.totalorder %s15, 1
      %p67 = por %p65, %p66
      %p68 = scmp.ne.s32.totalorder %s60, %s63
      %p69 = scmp.eq.s32.totalorder %s15, 0
      %p70 = por %p68, %p69
      %p71 = scmp.ne.s32.totalorder %s60, %s63
      %p72 = scmp.eq.s32.totalorder %s20, 1
      %p73 = por %p71, %p72
      %p74 = scmp.ne.s32.totalorder %s63, %s64
      %p75 = scmp.eq.s32.totalorder %s20, 0
      %p76 = por %p74, %p75
      %p77 = scmp.ne.s32.totalorder %s63, %s64
      %p78 = scmp.eq.s32.totalorder %s21, 1
      %p79 = por %p77, %p78
      %p81 = scmp.ne.s32.totalorder %s64, %s80
      %p82 = scmp.eq.s32.totalorder %s21, 0
      %p83 = por %p81, %p82
      %s84 = ssub.s32 %s22, %s34
      %s85 = ssub.s32 %s23, %s30
      %s86 = sor.u32 %s84, %s85
      %p87 = scmp.eq.s32.totalorder %s86, 0
      %s89 = sadd.s32 %s88, 1
      %s90 = scalar_select %p87, %s88, %s89
      %p93 = pneg %p87
      %p94 = scmp.eq.s32.totalorder %s15, 1
      %p95 = por %p93, %p94
      %p96 = scmp.ne.s32.totalorder %s88, %s91
      %p97 = scmp.eq.s32.totalorder %s15, 0
      %p98 = por %p96, %p97
      %p99 = scmp.ne.s32.totalorder %s88, %s91
      %p100 = scmp.eq.s32.totalorder %s20, 1
      %p101 = por %p99, %p100
      %p102 = scmp.ne.s32.totalorder %s91, %s92
      %p103 = scmp.eq.s32.totalorder %s20, 0
      %p104 = por %p102, %p103
      %p105 = scmp.ne.s32.totalorder %s91, %s92
      %p106 = scmp.eq.s32.totalorder %s21, 1
      %p107 = por %p105, %p106
      %p109 = scmp.ne.s32.totalorder %s92, %s108
      %p110 = scmp.eq.s32.totalorder %s21, 0
      %p111 = por %p109, %p110
      %p112 = scmp.le.s32.totalorder 1, %s15
      %p113 = scmp.lt.s32.totalorder %s15, 3
      %p114 = pnand %p112, %p113
      %p115 = pneg %p114
      // Predicated region
      $region9: #{tpu_custom_call.1} parent=5 // pred_check
        _
      $region10: #{tpu_custom_call.1} parent=5 // pred_check_branch
        %117 = sbr.rel (%p114) target = $region12
      $region11: #{tpu_custom_call.1} parent=5 // pred_region
        %s118 = ssub.s32 %s15, 1
        // Predicated region
        $region13: #{tpu_custom_call.1} parent=11 // pred_check
          %p119 = pneg %p48
        $region14: #{tpu_custom_call.1} parent=11 // pred_check_branch
          %121 = sbr.rel (%p119) target = $region16
        $region15: #{tpu_custom_call.1} parent=11 // pred_region
          %s123 = ssub.s32 4096, 4096
          %124 = vsyncadd [#allocation3], %s123
          %s125 = sshll.u32 [#allocation2], 4
          %s126 = int_to_ptr.vmem [resolvable:$true] %s125
          %131 = dma.hbm_to_vmem [thread:$0]  %s0, 4096, %s126, [#allocation3], 128, 128, 8
        $region16: #{tpu_custom_call.1} parent=11 // pred_fallthru
          _
      $region12: #{tpu_custom_call.1} parent=5 // pred_fallthru
        _
      %p132 = scmp.lt.s32.totalorder %s15, 2
      // Predicated region
      $region17: #{tpu_custom_call.1} parent=5 // pred_check
        %p133 = pneg %p132
      $region18: #{tpu_custom_call.1} parent=5 // pred_check_branch
        %135 = sbr.rel (%p133) target = $region20
      $region19: #{tpu_custom_call.1} parent=5 // pred_region
        // Predicated region
        $region21: #{tpu_custom_call.1} parent=19 // pred_check
          %p136 = pneg %p70
        $region22: #{tpu_custom_call.1} parent=19 // pred_check_branch
          %138 = sbr.rel (%p136) target = $region24
        $region23: #{tpu_custom_call.1} parent=19 // pred_region
          %s139 = sand.u32 %s60, 1
          %s140 = scalar_lea.sflag [#allocation6], %s139
          %s141 = sand.u32 %s60, 1
          %s142 = smul.addr %s141, 256
          %s143 = scalar_lea.vmem [#allocation5], %s142
          %s144 = smul.u32 16, %s22
          %s145 = smul.u32 2, %s23
          %s147 = ssub.s32 4096, 4096
          %148 = vsyncadd %s140, %s147
          %s149 = smul.addr %s144, 4
          %s150 = sadd.s32 %s145, %s149
          %s151 = smul.addr %s150, 128
          %s152 = scalar_lea.hbm %s1, %s151
          %s153 = sshll.u32 %s143, 4
          %s154 = int_to_ptr.vmem [resolvable:$true] %s153
          %159 = dma.hbm_to_vmem [thread:$0]  %s152, 4096, %s154, %s140, 512, 256, 16
        $region24: #{tpu_custom_call.1} parent=19 // pred_fallthru
          _
      $region20: #{tpu_custom_call.1} parent=5 // pred_fallthru
        _
      %p160 = scmp.le.s32.totalorder 1, %s15
      %p161 = scmp.lt.s32.totalorder %s15, 3
      %p162 = pnand %p160, %p161
      %p163 = pneg %p162
      // Predicated region
      $region25: #{tpu_custom_call.1} parent=5 // pred_check
        _
      $region26: #{tpu_custom_call.1} parent=5 // pred_check_branch
        %165 = sbr.rel (%p162) target = $region28
      $region27: #{tpu_custom_call.1} parent=5 // pred_region
        %s166 = ssub.s32 %s15, 1
        // Predicated region
        $region29: #{tpu_custom_call.1} parent=27 // pred_check
          %p167 = pneg %p48
        $region30: #{tpu_custom_call.1} parent=27 // pred_check_branch
          %169 = sbr.rel (%p167) target = $region32
        $region31: #{tpu_custom_call.1} parent=27 // pred_region
          %170 = dma.done [#allocation3], 4096
        $region32: #{tpu_custom_call.1} parent=27 // pred_fallthru
          _
        %s171 = sand.u32 %s63, 1
        %s172 = scalar_lea.sflag [#allocation6], %s171
        %s173 = sand.u32 %s63, 1
        %s174 = smul.addr %s173, 256
        %s175 = scalar_lea.vmem [#allocation5], %s174
        // Predicated region
        $region33: #{tpu_custom_call.1} parent=27 // pred_check
          %p176 = pneg %p76
        $region34: #{tpu_custom_call.1} parent=27 // pred_check_branch
          %178 = sbr.rel (%p176) target = $region36
        $region35: #{tpu_custom_call.1} parent=27 // pred_region
          %179 = dma.done %s172, 4096
        $region36: #{tpu_custom_call.1} parent=27 // pred_fallthru
          _
        %p180 = pneg %p48
        %p181 = pneg %p45
        %s182 = sand.u32 %s63, 1
        %s183 = scalar_lea.sflag [#allocation6], %s182
        %s184 = sand.u32 %s63, 1
        %s185 = smul.addr %s184, 256
        %s186 = scalar_lea.vmem [#allocation5], %s185
        %p187 = pneg %p76
        %p188 = pneg %p73
        %p189 = pneg %p104
        %p190 = pneg %p101
        %s191 = sand.u32 %s91, 1
        %s192 = scalar_lea.sflag [#allocation4], %s191
        %s193 = sand.u32 %s91, 1
        %s194 = smul.addr %s193, 128
        %s195 = scalar_lea.vmem [#allocation7], %s194
        %s196 = smul.u32 16, %s24
        %s197 = smul.u32 2, %s25
        %s198 = smul.u32 16, %s24
        %v199 = vld [vmem:[%s175] sm:$0xff]
        %v200 = vld [vmem:[%s175 + $0x8] sm:$0xff]
        %v201 = vld [vmem:[%s175 + $0x10] sm:$0xff]
        %v202 = vld [vmem:[%s175 + $0x18] sm:$0xff]
        %v203 = vld [vmem:[%s175 + $0x20] sm:$0xff]
        %v204 = vld [vmem:[%s175 + $0x28] sm:$0xff]
        %v205 = vld [vmem:[%s175 + $0x30] sm:$0xff]
        %v206 = vld [vmem:[%s175 + $0x38] sm:$0xff]
        %v207 = vld [vmem:[%s175 + $0x40] sm:$0xff]
        %v208 = vld [vmem:[%s175 + $0x48] sm:$0xff]
        %v209 = vld [vmem:[%s175 + $0x50] sm:$0xff]
        %v210 = vld [vmem:[%s175 + $0x58] sm:$0xff]
        %v211 = vld [vmem:[%s175 + $0x60] sm:$0xff]
        %v212 = vld [vmem:[%s175 + $0x68] sm:$0xff]
        %v213 = vld [vmem:[%s175 + $0x70] sm:$0xff]
        %v214 = vld [vmem:[%s175 + $0x78] sm:$0xff]
        %v215 = vld [vmem:[%s175 + $0x80] sm:$0xff]
        %v216 = vld [vmem:[%s175 + $0x88] sm:$0xff]
        %v217 = vld [vmem:[%s175 + $0x90] sm:$0xff]
        %v218 = vld [vmem:[%s175 + $0x98] sm:$0xff]
        %v219 = vld [vmem:[%s175 + $0xa0] sm:$0xff]
        %v220 = vld [vmem:[%s175 + $0xa8] sm:$0xff]
        %v221 = vld [vmem:[%s175 + $0xb0] sm:$0xff]
        %v222 = vld [vmem:[%s175 + $0xb8] sm:$0xff]
        %v223 = vld [vmem:[%s175 + $0xc0] sm:$0xff]
        %v224 = vld [vmem:[%s175 + $0xc8] sm:$0xff]
        %v225 = vld [vmem:[%s175 + $0xd0] sm:$0xff]
        %v226 = vld [vmem:[%s175 + $0xd8] sm:$0xff]
        %v227 = vld [vmem:[%s175 + $0xe0] sm:$0xff]
        %v228 = vld [vmem:[%s175 + $0xe8] sm:$0xff]
        %v229 = vld [vmem:[%s175 + $0xf0] sm:$0xff]
        %v230 = vld [vmem:[%s175 + $0xf8] sm:$0xff]
        %v231 = vmul.f32 %v199, %v199
        %v232 = vmul.f32 %v200, %v200
        %v233 = vmul.f32 %v201, %v201
        %v234 = vmul.f32 %v202, %v202
        %v235 = vmul.f32 %v203, %v203
        %v236 = vmul.f32 %v204, %v204
        %v237 = vmul.f32 %v205, %v205
        %v238 = vmul.f32 %v206, %v206
        %v239 = vmul.f32 %v207, %v207
        %v240 = vmul.f32 %v208, %v208
        %v241 = vmul.f32 %v209, %v209
        %v242 = vmul.f32 %v210, %v210
        %v243 = vmul.f32 %v211, %v211
        %v244 = vmul.f32 %v212, %v212
        %v245 = vmul.f32 %v213, %v213
        %v246 = vmul.f32 %v214, %v214
        %v247 = vmul.f32 %v215, %v215
        %v248 = vmul.f32 %v216, %v216
        %v249 = vmul.f32 %v217, %v217
        %v250 = vmul.f32 %v218, %v218
        %v251 = vmul.f32 %v219, %v219
        %v252 = vmul.f32 %v220, %v220
        %v253 = vmul.f32 %v221, %v221
        %v254 = vmul.f32 %v222, %v222
        %v255 = vmul.f32 %v223, %v223
        %v256 = vmul.f32 %v224, %v224
        %v257 = vmul.f32 %v225, %v225
        %v258 = vmul.f32 %v226, %v226
        %v259 = vmul.f32 %v227, %v227
        %v260 = vmul.f32 %v228, %v228
        %v261 = vmul.f32 %v229, %v229
        %v262 = vmul.f32 %v230, %v230
        %v263 = vld [vmem:[#allocation2] sm:$0xff]
        %v264 = vld [vmem:[#allocation2 + $0x8] sm:$0xff]
        %v265 = vld [vmem:[#allocation2 + $0x10] sm:$0xff]
        %v266 = vld [vmem:[#allocation2 + $0x18] sm:$0xff]
        %v267 = vld [vmem:[#allocation2 + $0x20] sm:$0xff]
        %v268 = vld [vmem:[#allocation2 + $0x28] sm:$0xff]
        %v269 = vld [vmem:[#allocation2 + $0x30] sm:$0xff]
        %v270 = vld [vmem:[#allocation2 + $0x38] sm:$0xff]
        %v271 = vld [vmem:[#allocation2 + $0x40] sm:$0xff]
        %v272 = vld [vmem:[#allocation2 + $0x48] sm:$0xff]
        %v273 = vld [vmem:[#allocation2 + $0x50] sm:$0xff]
        %v274 = vld [vmem:[#allocation2 + $0x58] sm:$0xff]
        %v275 = vld [vmem:[#allocation2 + $0x60] sm:$0xff]
        %v276 = vld [vmem:[#allocation2 + $0x68] sm:$0xff]
        %v277 = vld [vmem:[#allocation2 + $0x70] sm:$0xff]
        %v278 = vld [vmem:[#allocation2 + $0x78] sm:$0xff]
        %v279 = vld [vmem:[#allocation2 + $0x80] sm:$0xff]
        %v280 = vld [vmem:[#allocation2 + $0x88] sm:$0xff]
        %v281 = vld [vmem:[#allocation2 + $0x90] sm:$0xff]
        %v282 = vld [vmem:[#allocation2 + $0x98] sm:$0xff]
        %v283 = vld [vmem:[#allocation2 + $0xa0] sm:$0xff]
        %v284 = vld [vmem:[#allocation2 + $0xa8] sm:$0xff]
        %v285 = vld [vmem:[#allocation2 + $0xb0] sm:$0xff]
        %v286 = vld [vmem:[#allocation2 + $0xb8] sm:$0xff]
        %v287 = vld [vmem:[#allocation2 + $0xc0] sm:$0xff]
        %v288 = vld [vmem:[#allocation2 + $0xc8] sm:$0xff]
        %v289 = vld [vmem:[#allocation2 + $0xd0] sm:$0xff]
        %v290 = vld [vmem:[#allocation2 + $0xd8] sm:$0xff]
        %v291 = vld [vmem:[#allocation2 + $0xe0] sm:$0xff]
        %v292 = vld [vmem:[#allocation2 + $0xe8] sm:$0xff]
        %v293 = vld [vmem:[#allocation2 + $0xf0] sm:$0xff]
        %v294 = vld [vmem:[#allocation2 + $0xf8] sm:$0xff]
        %295 = vmatprep.subr.mxu0 0.0
        %v296 = vand.u32 %v263, 4294901760
        %297 = vmatpush1.msra.mxu0 %v296
        %298 = vmatprep.subr.mxu0 0.0
        %v299 = vand.u32 %v264, 4294901760
        %300 = vmatpush1.msra.mxu0 %v299
        %301 = vmatprep.subr.mxu0 0.0
        %v302 = vand.u32 %v265, 4294901760
        %303 = vmatpush1.msra.mxu0 %v302
        %304 = vmatprep.subr.mxu0 0.0
        %v305 = vand.u32 %v266, 4294901760
        %306 = vmatpush1.msra.mxu0 %v305
        %307 = vmatprep.subr.mxu0 0.0
        %v308 = vand.u32 %v267, 4294901760
        %309 = vmatpush1.msra.mxu0 %v308
        %310 = vmatprep.subr.mxu0 0.0
        %v311 = vand.u32 %v268, 4294901760
        %312 = vmatpush1.msra.mxu0 %v311
        %313 = vmatprep.subr.mxu0 0.0
        %v314 = vand.u32 %v269, 4294901760
        %315 = vmatpush1.msra.mxu0 %v314
        %316 = vmatprep.subr.mxu0 0.0
        %v317 = vand.u32 %v270, 4294901760
        %318 = vmatpush1.msra.mxu0 %v317
        %319 = vmatprep.subr.mxu0 0.0
        %v320 = vand.u32 %v271, 4294901760
        %321 = vmatpush1.msra.mxu0 %v320
        %322 = vmatprep.subr.mxu0 0.0
        %v323 = vand.u32 %v272, 4294901760
        %324 = vmatpush1.msra.mxu0 %v323
        %325 = vmatprep.subr.mxu0 0.0
        %v326 = vand.u32 %v273, 4294901760
        %327 = vmatpush1.msra.mxu0 %v326
        %328 = vmatprep.subr.mxu0 0.0
        %v329 = vand.u32 %v274, 4294901760
        %330 = vmatpush1.msra.mxu0 %v329
        %331 = vmatprep.subr.mxu0 0.0
        %v332 = vand.u32 %v275, 4294901760
        %333 = vmatpush1.msra.mxu0 %v332
        %334 = vmatprep.subr.mxu0 0.0
        %v335 = vand.u32 %v276, 4294901760
        %336 = vmatpush1.msra.mxu0 %v335
        %337 = vmatprep.subr.mxu0 0.0
        %v338 = vand.u32 %v277, 4294901760
        %339 = vmatpush1.msra.mxu0 %v338
        %340 = vmatprep.subr.mxu0 0.0
        %v341 = vand.u32 %v278, 4294901760
        %342 = vmatpush1.msra.mxu0 %v341
        %343 = vmatprep.subr.mxu0 0.0
        %v344 = vand.u32 %v279, 4294901760
        %345 = vmatpush1.msra.mxu0 %v344
        %346 = vmatprep.subr.mxu0 0.0
        %v347 = vand.u32 %v280, 4294901760
        %348 = vmatpush1.msra.mxu0 %v347
        %349 = vmatprep.subr.mxu0 0.0
        %v350 = vand.u32 %v281, 4294901760
        %351 = vmatpush1.msra.mxu0 %v350
        %352 = vmatprep.subr.mxu0 0.0
        %v353 = vand.u32 %v282, 4294901760
        %354 = vmatpush1.msra.mxu0 %v353
        %355 = vmatprep.subr.mxu0 0.0
        %v356 = vand.u32 %v283, 4294901760
        %357 = vmatpush1.msra.mxu0 %v356
        %358 = vmatprep.subr.mxu0 0.0
        %v359 = vand.u32 %v284, 4294901760
        %360 = vmatpush1.msra.mxu0 %v359
        %361 = vmatprep.subr.mxu0 0.0
        %v362 = vand.u32 %v285, 4294901760
        %363 = vmatpush1.msra.mxu0 %v362
        %364 = vmatprep.subr.mxu0 0.0
        %v365 = vand.u32 %v286, 4294901760
        %366 = vmatpush1.msra.mxu0 %v365
        %367 = vmatprep.subr.mxu0 0.0
        %v368 = vand.u32 %v287, 4294901760
        %369 = vmatpush1.msra.mxu0 %v368
        %370 = vmatprep.subr.mxu0 0.0
        %v371 = vand.u32 %v288, 4294901760
        %372 = vmatpush1.msra.mxu0 %v371
        %373 = vmatprep.subr.mxu0 0.0
        %v374 = vand.u32 %v289, 4294901760
        %375 = vmatpush1.msra.mxu0 %v374
        %376 = vmatprep.subr.mxu0 0.0
        %v377 = vand.u32 %v290, 4294901760
        %378 = vmatpush1.msra.mxu0 %v377
        %379 = vmatprep.subr.mxu0 0.0
        %v380 = vand.u32 %v291, 4294901760
        %381 = vmatpush1.msra.mxu0 %v380
        %382 = vmatprep.subr.mxu0 0.0
        %v383 = vand.u32 %v292, 4294901760
        %384 = vmatpush1.msra.mxu0 %v383
        %385 = vmatprep.subr.mxu0 0.0
        %v386 = vand.u32 %v293, 4294901760
        %387 = vmatpush1.msra.mxu0 %v386
        %388 = vmatprep.subr.mxu0 0.0
        %v389 = vand.u32 %v294, 4294901760
        %390 = vmatpush1.msra.mxu0 %v389
        %v391 = vand.u32 %v232, 4294901760
        %v392 = vsub.f32 %v232, %v391
        %v393 = vand.u32 %v392, 4294901760
        %v394 = vsub.f32 %v392, %v393
        %v395 = vand.u32 %v394, 4294901760
        %396 = vmatprep.mubr.f32.mxu0 %v395
        %v397 = vand.u32 %v231, 4294901760
        %v398 = vsub.f32 %v231, %v397
        %v399 = vand.u32 %v398, 4294901760
        %v400 = vsub.f32 %v398, %v399
        %v401 = vand.u32 %v400, 4294901760
        %402 = vmatmul.mubr.f32.gmra.mrb[0].mxu0 %v401
        %v403 = vpop.f32.mrb[0].mxu0
        %v404 = vadd.f32 0.0, %v403
        %v405 = vpop.f32.mrb[0].mxu0
        %v406 = vand.u32 %v234, 4294901760
        %v407 = vsub.f32 %v234, %v406
        %v408 = vand.u32 %v407, 4294901760
        %v409 = vsub.f32 %v407, %v408
        %v410 = vand.u32 %v409, 4294901760
        %411 = vmatprep.mubr.f32.mxu0 %v410
        %v412 = vand.u32 %v233, 4294901760
        %v413 = vsub.f32 %v233, %v412
        %v414 = vand.u32 %v413, 4294901760
        %v415 = vsub.f32 %v413, %v414
        %v416 = vand.u32 %v415, 4294901760
        %417 = vmatmul.mubr.f32.gmra.mrb[0].mxu0 %v416
        %v418 = vpop.f32.mrb[0].mxu0
        %v419 = vadd.f32 0.0, %v418
        %v420 = vpop.f32.mrb[0].mxu0
        %v421 = vand.u32 %v236, 4294901760
        %v422 = vsub.f32 %v236, %v421
        %v423 = vand.u32 %v422, 4294901760
        %v424 = vsub.f32 %v422, %v423
        %v425 = vand.u32 %v424, 4294901760
        %426 = vmatprep.mubr.f32.mxu0 %v425
        %v427 = vand.u32 %v235, 4294901760
        %v428 = vsub.f32 %v235, %v427
        %v429 = vand.u32 %v428, 4294901760
        %v430 = vsub.f32 %v428, %v429
        %v431 = vand.u32 %v430, 4294901760
        %432 = vmatmul.mubr.f32.gmra.mrb[0].mxu0 %v431
        %v433 = vpop.f32.mrb[0].mxu0
        %v434 = vadd.f32 0.0, %v433
        %v435 = vpop.f32.mrb[0].mxu0
        %v436 = vand.u32 %v238, 4294901760
        %v437 = vsub.f32 %v238, %v436
        %v438 = vand.u32 %v437, 4294901760
        %v439 = vsub.f32 %v437, %v438
        %v440 = vand.u32 %v439, 4294901760
        %441 = vmatprep.mubr.f32.mxu0 %v440
        %v442 = vand.u32 %v237, 4294901760
        %v443 = vsub.f32 %v237, %v442
        %v444 = vand.u32 %v443, 4294901760
        %v445 = vsub.f32 %v443, %v444
        %v446 = vand.u32 %v445, 4294901760
        %447 = vmatmul.mubr.f32.gmra.mrb[0].mxu0 %v446
        %v448 = vpop.f32.mrb[0].mxu0
        %v449 = vadd.f32 0.0, %v448
        %v450 = vpop.f32.mrb[0].mxu0
        %v451 = vand.u32 %v240, 4294901760
        %v452 = vsub.f32 %v240, %v451
        %v453 = vand.u32 %v452, 4294901760
        %v454 = vsub.f32 %v452, %v453
        %v455 = vand.u32 %v454, 4294901760
        %456 = vmatprep.mubr.f32.mxu0 %v455
        %v457 = vand.u32 %v239, 4294901760
        %v458 = vsub.f32 %v239, %v457
        %v459 = vand.u32 %v458, 4294901760
        %v460 = vsub.f32 %v458, %v459
        %v461 = vand.u32 %v460, 4294901760
        %462 = vmatmul.mubr.f32.gmra.mrb[0].mxu0 %v461
        %v463 = vpop.f32.mrb[0].mxu0
        %v464 = vadd.f32 0.0, %v463
        %v465 = vpop.f32.mrb[0].mxu0
        %v466 = vand.u32 %v242, 4294901760
        %v467 = vsub.f32 %v242, %v466
        %v468 = vand.u32 %v467, 4294901760
        %v469 = vsub.f32 %v467, %v468
        %v470 = vand.u32 %v469, 4294901760
        %471 = vmatprep.mubr.f32.mxu0 %v470
        %v472 = vand.u32 %v241, 4294901760
        %v473 = vsub.f32 %v241, %v472
        %v474 = vand.u32 %v473, 4294901760
        %v475 = vsub.f32 %v473, %v474
        %v476 = vand.u32 %v475, 4294901760
        %477 = vmatmul.mubr.f32.gmra.mrb[0].mxu0 %v476
        %v478 = vpop.f32.mrb[0].mxu0
        %v479 = vadd.f32 0.0, %v478
        %v480 = vpop.f32.mrb[0].mxu0
        %v481 = vand.u32 %v244, 4294901760
        %v482 = vsub.f32 %v244, %v481
        %v483 = vand.u32 %v482, 4294901760
        %v484 = vsub.f32 %v482, %v483
        %v485 = vand.u32 %v484, 4294901760
        %486 = vmatprep.mubr.f32.mxu0 %v485
        %v487 = vand.u32 %v243, 4294901760
        %v488 = vsub.f32 %v243, %v487
        %v489 = vand.u32 %v488, 4294901760
        %v490 = vsub.f32 %v488, %v489
        %v491 = vand.u32 %v490, 4294901760
        %492 = vmatmul.mubr.f32.gmra.mrb[0].mxu0 %v491
        %v493 = vpop.f32.mrb[0].mxu0
        %v494 = vadd.f32 0.0, %v493
        %v495 = vpop.f32.mrb[0].mxu0
        %v496 = vand.u32 %v246, 4294901760
        %v497 = vsub.f32 %v246, %v496
        %v498 = vand.u32 %v497, 4294901760
        %v499 = vsub.f32 %v497, %v498
        %v500 = vand.u32 %v499, 4294901760
        %501 = vmatprep.mubr.f32.mxu0 %v500
        %v502 = vand.u32 %v245, 4294901760
        %v503 = vsub.f32 %v245, %v502
        %v504 = vand.u32 %v503, 4294901760
        %v505 = vsub.f32 %v503, %v504
        %v506 = vand.u32 %v505, 4294901760
        %507 = vmatmul.mubr.f32.gmra.mrb[0].mxu0 %v506
        %v508 = vpop.f32.mrb[0].mxu0
        %v509 = vadd.f32 0.0, %v508
        %v510 = vpop.f32.mrb[0].mxu0
        %v511 = vand.u32 %v248, 4294901760
        %v512 = vsub.f32 %v248, %v511
        %v513 = vand.u32 %v512, 4294901760
        %v514 = vsub.f32 %v512, %v513
        %v515 = vand.u32 %v514, 4294901760
        %516 = vmatprep.mubr.f32.mxu0 %v515
        %v517 = vand.u32 %v247, 4294901760
        %v518 = vsub.f32 %v247, %v517
        %v519 = vand.u32 %v518, 4294901760
        %v520 = vsub.f32 %v518, %v519
        %v521 = vand.u32 %v520, 4294901760
        %522 = vmatmul.mubr.f32.gmra.mrb[0].mxu0 %v521
        %v523 = vpop.f32.mrb[0].mxu0
        %v524 = vadd.f32 0.0, %v523
        %v525 = vpop.f32.mrb[0].mxu0
        %v526 = vand.u32 %v250, 4294901760
        %v527 = vsub.f32 %v250, %v526
        %v528 = vand.u32 %v527, 4294901760
        %v529 = vsub.f32 %v527, %v528
        %v530 = vand.u32 %v529, 4294901760
        %531 = vmatprep.mubr.f32.mxu0 %v530
        %v532 = vand.u32 %v249, 4294901760
        %v533 = vsub.f32 %v249, %v532
        %v534 = vand.u32 %v533, 4294901760
        %v535 = vsub.f32 %v533, %v534
        %v536 = vand.u32 %v535, 4294901760
        %537 = vmatmul.mubr.f32.gmra.mrb[0].mxu0 %v536
        %v538 = vpop.f32.mrb[0].mxu0
        %v539 = vadd.f32 0.0, %v538
        %v540 = vpop.f32.mrb[0].mxu0
        %v541 = vand.u32 %v252, 4294901760
        %v542 = vsub.f32 %v252, %v541
        %v543 = vand.u32 %v542, 4294901760
        %v544 = vsub.f32 %v542, %v543
        %v545 = vand.u32 %v544, 4294901760
        %546 = vmatprep.mubr.f32.mxu0 %v545
        %v547 = vand.u32 %v251, 4294901760
        %v548 = vsub.f32 %v251, %v547
        %v549 = vand.u32 %v548, 4294901760
        %v550 = vsub.f32 %v548, %v549
        %v551 = vand.u32 %v550, 4294901760
        %552 = vmatmul.mubr.f32.gmra.mrb[0].mxu0 %v551
        %v553 = vpop.f32.mrb[0].mxu0
        %v554 = vadd.f32 0.0, %v553
        %v555 = vpop.f32.mrb[0].mxu0
        %v556 = vand.u32 %v254, 4294901760
        %v557 = vsub.f32 %v254, %v556
        %v558 = vand.u32 %v557, 4294901760
        %v559 = vsub.f32 %v557, %v558
        %v560 = vand.u32 %v559, 4294901760
        %561 = vmatprep.mubr.f32.mxu0 %v560
        %v562 = vand.u32 %v253, 4294901760
        %v563 = vsub.f32 %v253, %v562
        %v564 = vand.u32 %v563, 4294901760
        %v565 = vsub.f32 %v563, %v564
        %v566 = vand.u32 %v565, 4294901760
        %567 = vmatmul.mubr.f32.gmra.mrb[0].mxu0 %v566
        %v568 = vpop.f32.mrb[0].mxu0
        %v569 = vadd.f32 0.0, %v568
        %v570 = vpop.f32.mrb[0].mxu0
        %v571 = vand.u32 %v256, 4294901760
        %v572 = vsub.f32 %v256, %v571
        %v573 = vand.u32 %v572, 4294901760
        %v574 = vsub.f32 %v572, %v573
        %v575 = vand.u32 %v574, 4294901760
        %576 = vmatprep.mubr.f32.mxu0 %v575
        %v577 = vand.u32 %v255, 4294901760
        %v578 = vsub.f32 %v255, %v577
        %v579 = vand.u32 %v578, 4294901760
        %v580 = vsub.f32 %v578, %v579
        %v581 = vand.u32 %v580, 4294901760
        %582 = vmatmul.mubr.f32.gmra.mrb[0].mxu0 %v581
        %v583 = vpop.f32.mrb[0].mxu0
        %v584 = vadd.f32 0.0, %v583
        %v585 = vpop.f32.mrb[0].mxu0
        %v586 = vand.u32 %v258, 4294901760
        %v587 = vsub.f32 %v258, %v586
        %v588 = vand.u32 %v587, 4294901760
        %v589 = vsub.f32 %v587, %v588
        %v590 = vand.u32 %v589, 4294901760
        %591 = vmatprep.mubr.f32.mxu0 %v590
        %v592 = vand.u32 %v257, 4294901760
        %v593 = vsub.f32 %v257, %v592
        %v594 = vand.u32 %v593, 4294901760
        %v595 = vsub.f32 %v593, %v594
        %v596 = vand.u32 %v595, 4294901760
        %597 = vmatmul.mubr.f32.gmra.mrb[0].mxu0 %v596
        %v598 = vpop.f32.mrb[0].mxu0
        %v599 = vadd.f32 0.0, %v598
        %v600 = vpop.f32.mrb[0].mxu0
        %v601 = vand.u32 %v260, 4294901760
        %v602 = vsub.f32 %v260, %v601
        %v603 = vand.u32 %v602, 4294901760
        %v604 = vsub.f32 %v602, %v603
        %v605 = vand.u32 %v604, 4294901760
        %606 = vmatprep.mubr.f32.mxu0 %v605
        %v607 = vand.u32 %v259, 4294901760
        %v608 = vsub.f32 %v259, %v607
        %v609 = vand.u32 %v608, 4294901760
        %v610 = vsub.f32 %v608, %v609
        %v611 = vand.u32 %v610, 4294901760
        %612 = vmatmul.mubr.f32.gmra.mrb[0].mxu0 %v611
        %v613 = vpop.f32.mrb[0].mxu0
        %v614 = vadd.f32 0.0, %v613
        %v615 = vpop.f32.mrb[0].mxu0
        %v616 = vand.u32 %v262, 4294901760
        %v617 = vsub.f32 %v262, %v616
        %v618 = vand.u32 %v617, 4294901760
        %v619 = vsub.f32 %v617, %v618
        %v620 = vand.u32 %v619, 4294901760
        %621 = vmatprep.mubr.f32.mxu0 %v620
        %v622 = vand.u32 %v261, 4294901760
        %v623 = vsub.f32 %v261, %v622
        %v624 = vand.u32 %v623, 4294901760
        %v625 = vsub.f32 %v623, %v624
        %v626 = vand.u32 %v625, 4294901760
        %627 = vmatmul.mubr.f32.gmra.mrb[0].mxu0 %v626
        %v628 = vpop.f32.mrb[0].mxu0
        %v629 = vadd.f32 0.0, %v628
        %v630 = vpop.f32.mrb[0].mxu0
        %631 = vdwg.mxu0
        %632 = vmatprep.subr.mxu0 0.0
        %v633 = vand.u32 %v263, 4294901760
        %v634 = vsub.f32 %v263, %v633
        %v635 = vand.u32 %v634, 4294901760
        %v636 = vsub.f32 %v634, %v635
        %v637 = vand.u32 %v636, 4294901760
        %638 = vmatpush1.msra.mxu0 %v637
        %639 = vmatprep.subr.mxu0 0.0
        %v640 = vand.u32 %v264, 4294901760
        %v641 = vsub.f32 %v264, %v640
        %v642 = vand.u32 %v641, 4294901760
        %v643 = vsub.f32 %v641, %v642
        %v644 = vand.u32 %v643, 4294901760
        %645 = vmatpush1.msra.mxu0 %v644
        %646 = vmatprep.subr.mxu0 0.0
        %v647 = vand.u32 %v265, 4294901760
        %v648 = vsub.f32 %v265, %v647
        %v649 = vand.u32 %v648, 4294901760
        %v650 = vsub.f32 %v648, %v649
        %v651 = vand.u32 %v650, 4294901760
        %652 = vmatpush1.msra.mxu0 %v651
        %653 = vmatprep.subr.mxu0 0.0
        %v654 = vand.u32 %v266, 4294901760
        %v655 = vsub.f32 %v266, %v654
        %v656 = vand.u32 %v655, 4294901760
        %v657 = vsub.f32 %v655, %v656
        %v658 = vand.u32 %v657, 4294901760
        %659 = vmatpush1.msra.mxu0 %v658
        %660 = vmatprep.subr.mxu0 0.0
        %v661 = vand.u32 %v267, 4294901760
        %v662 = vsub.f32 %v267, %v661
        %v663 = vand.u32 %v662, 4294901760
        %v664 = vsub.f32 %v662, %v663
        %v665 = vand.u32 %v664, 4294901760
        %666 = vmatpush1.msra.mxu0 %v665
        %667 = vmatprep.subr.mxu0 0.0
        %v668 = vand.u32 %v268, 4294901760
        %v669 = vsub.f32 %v268, %v668
        %v670 = vand.u32 %v669, 4294901760
        %v671 = vsub.f32 %v669, %v670
        %v672 = vand.u32 %v671, 4294901760
        %673 = vmatpush1.msra.mxu0 %v672
        %674 = vmatprep.subr.mxu0 0.0
        %v675 = vand.u32 %v269, 4294901760
        %v676 = vsub.f32 %v269, %v675
        %v677 = vand.u32 %v676, 4294901760
        %v678 = vsub.f32 %v676, %v677
        %v679 = vand.u32 %v678, 4294901760
        %680 = vmatpush1.msra.mxu0 %v679
        %681 = vmatprep.subr.mxu0 0.0
        %v682 = vand.u32 %v270, 4294901760
        %v683 = vsub.f32 %v270, %v682
        %v684 = vand.u32 %v683, 4294901760
        %v685 = vsub.f32 %v683, %v684
        %v686 = vand.u32 %v685, 4294901760
        %687 = vmatpush1.msra.mxu0 %v686
        %688 = vmatprep.subr.mxu0 0.0
        %v689 = vand.u32 %v271, 4294901760
        %v690 = vsub.f32 %v271, %v689
        %v691 = vand.u32 %v690, 4294901760
        %v692 = vsub.f32 %v690, %v691
        %v693 = vand.u32 %v692, 4294901760
        %694 = vmatpush1.msra.mxu0 %v693
        %695 = vmatprep.subr.mxu0 0.0
        %v696 = vand.u32 %v272, 4294901760
        %v697 = vsub.f32 %v272, %v696
        %v698 = vand.u32 %v697, 4294901760
        %v699 = vsub.f32 %v697, %v698
        %v700 = vand.u32 %v699, 4294901760
        %701 = vmatpush1.msra.mxu0 %v700
        %702 = vmatprep.subr.mxu0 0.0
        %v703 = vand.u32 %v273, 4294901760
        %v704 = vsub.f32 %v273, %v703
        %v705 = vand.u32 %v704, 4294901760
        %v706 = vsub.f32 %v704, %v705
        %v707 = vand.u32 %v706, 4294901760
        %708 = vmatpush1.msra.mxu0 %v707
        %709 = vmatprep.subr.mxu0 0.0
        %v710 = vand.u32 %v274, 4294901760
        %v711 = vsub.f32 %v274, %v710
        %v712 = vand.u32 %v711, 4294901760
        %v713 = vsub.f32 %v711, %v712
        %v714 = vand.u32 %v713, 4294901760
        %715 = vmatpush1.msra.mxu0 %v714
        %716 = vmatprep.subr.mxu0 0.0
        %v717 = vand.u32 %v275, 4294901760
        %v718 = vsub.f32 %v275, %v717
        %v719 = vand.u32 %v718, 4294901760
        %v720 = vsub.f32 %v718, %v719
        %v721 = vand.u32 %v720, 4294901760
        %722 = vmatpush1.msra.mxu0 %v721
        %723 = vmatprep.subr.mxu0 0.0
        %v724 = vand.u32 %v276, 4294901760
        %v725 = vsub.f32 %v276, %v724
        %v726 = vand.u32 %v725, 4294901760
        %v727 = vsub.f32 %v725, %v726
        %v728 = vand.u32 %v727, 4294901760
        %729 = vmatpush1.msra.mxu0 %v728
        %730 = vmatprep.subr.mxu0 0.0
        %v731 = vand.u32 %v277, 4294901760
        %v732 = vsub.f32 %v277, %v731
        %v733 = vand.u32 %v732, 4294901760
        %v734 = vsub.f32 %v732, %v733
        %v735 = vand.u32 %v734, 4294901760
        %736 = vmatpush1.msra.mxu0 %v735
        %737 = vmatprep.subr.mxu0 0.0
        %v738 = vand.u32 %v278, 4294901760
        %v739 = vsub.f32 %v278, %v738
        %v740 = vand.u32 %v739, 4294901760
        %v741 = vsub.f32 %v739, %v740
        %v742 = vand.u32 %v741, 4294901760
        %743 = vmatpush1.msra.mxu0 %v742
        %744 = vmatprep.subr.mxu0 0.0
        %v745 = vand.u32 %v279, 4294901760
        %v746 = vsub.f32 %v279, %v745
        %v747 = vand.u32 %v746, 4294901760
        %v748 = vsub.f32 %v746, %v747
        %v749 = vand.u32 %v748, 4294901760
        %750 = vmatpush1.msra.mxu0 %v749
        %751 = vmatprep.subr.mxu0 0.0
        %v752 = vand.u32 %v280, 4294901760
        %v753 = vsub.f32 %v280, %v752
        %v754 = vand.u32 %v753, 4294901760
        %v755 = vsub.f32 %v753, %v754
        %v756 = vand.u32 %v755, 4294901760
        %757 = vmatpush1.msra.mxu0 %v756
        %758 = vmatprep.subr.mxu0 0.0
        %v759 = vand.u32 %v281, 4294901760
        %v760 = vsub.f32 %v281, %v759
        %v761 = vand.u32 %v760, 4294901760
        %v762 = vsub.f32 %v760, %v761
        %v763 = vand.u32 %v762, 4294901760
        %764 = vmatpush1.msra.mxu0 %v763
        %765 = vmatprep.subr.mxu0 0.0
        %v766 = vand.u32 %v282, 4294901760
        %v767 = vsub.f32 %v282, %v766
        %v768 = vand.u32 %v767, 4294901760
        %v769 = vsub.f32 %v767, %v768
        %v770 = vand.u32 %v769, 4294901760
        %771 = vmatpush1.msra.mxu0 %v770
        %772 = vmatprep.subr.mxu0 0.0
        %v773 = vand.u32 %v283, 4294901760
        %v774 = vsub.f32 %v283, %v773
        %v775 = vand.u32 %v774, 4294901760
        %v776 = vsub.f32 %v774, %v775
        %v777 = vand.u32 %v776, 4294901760
        %778 = vmatpush1.msra.mxu0 %v777
        %779 = vmatprep.subr.mxu0 0.0
        %v780 = vand.u32 %v284, 4294901760
        %v781 = vsub.f32 %v284, %v780
        %v782 = vand.u32 %v781, 4294901760
        %v783 = vsub.f32 %v781, %v782
        %v784 = vand.u32 %v783, 4294901760
        %785 = vmatpush1.msra.mxu0 %v784
        %786 = vmatprep.subr.mxu0 0.0
        %v787 = vand.u32 %v285, 4294901760
        %v788 = vsub.f32 %v285, %v787
        %v789 = vand.u32 %v788, 4294901760
        %v790 = vsub.f32 %v788, %v789
        %v791 = vand.u32 %v790, 4294901760
        %792 = vmatpush1.msra.mxu0 %v791
        %793 = vmatprep.subr.mxu0 0.0
        %v794 = vand.u32 %v286, 4294901760
        %v795 = vsub.f32 %v286, %v794
        %v796 = vand.u32 %v795, 4294901760
        %v797 = vsub.f32 %v795, %v796
        %v798 = vand.u32 %v797, 4294901760
        %799 = vmatpush1.msra.mxu0 %v798
        %800 = vmatprep.subr.mxu0 0.0
        %v801 = vand.u32 %v287, 4294901760
        %v802 = vsub.f32 %v287, %v801
        %v803 = vand.u32 %v802, 4294901760
        %v804 = vsub.f32 %v802, %v803
        %v805 = vand.u32 %v804, 4294901760
        %806 = vmatpush1.msra.mxu0 %v805
        %807 = vmatprep.subr.mxu0 0.0
        %v808 = vand.u32 %v288, 4294901760
        %v809 = vsub.f32 %v288, %v808
        %v810 = vand.u32 %v809, 4294901760
        %v811 = vsub.f32 %v809, %v810
        %v812 = vand.u32 %v811, 4294901760
        %813 = vmatpush1.msra.mxu0 %v812
        %814 = vmatprep.subr.mxu0 0.0
        %v815 = vand.u32 %v289, 4294901760
        %v816 = vsub.f32 %v289, %v815
        %v817 = vand.u32 %v816, 4294901760
        %v818 = vsub.f32 %v816, %v817
        %v819 = vand.u32 %v818, 4294901760
        %820 = vmatpush1.msra.mxu0 %v819
        %821 = vmatprep.subr.mxu0 0.0
        %v822 = vand.u32 %v290, 4294901760
        %v823 = vsub.f32 %v290, %v822
        %v824 = vand.u32 %v823, 4294901760
        %v825 = vsub.f32 %v823, %v824
        %v826 = vand.u32 %v825, 4294901760
        %827 = vmatpush1.msra.mxu0 %v826
        %828 = vmatprep.subr.mxu0 0.0
        %v829 = vand.u32 %v291, 4294901760
        %v830 = vsub.f32 %v291, %v829
        %v831 = vand.u32 %v830, 4294901760
        %v832 = vsub.f32 %v830, %v831
        %v833 = vand.u32 %v832, 4294901760
        %834 = vmatpush1.msra.mxu0 %v833
        %835 = vmatprep.subr.mxu0 0.0
        %v836 = vand.u32 %v292, 4294901760
        %v837 = vsub.f32 %v292, %v836
        %v838 = vand.u32 %v837, 4294901760
        %v839 = vsub.f32 %v837, %v838
        %v840 = vand.u32 %v839, 4294901760
        %841 = vmatpush1.msra.mxu0 %v840
        %842 = vmatprep.subr.mxu0 0.0
        %v843 = vand.u32 %v293, 4294901760
        %v844 = vsub.f32 %v293, %v843
        %v845 = vand.u32 %v844, 4294901760
        %v846 = vsub.f32 %v844, %v845
        %v847 = vand.u32 %v846, 4294901760
        %848 = vmatpush1.msra.mxu0 %v847
        %849 = vmatprep.subr.mxu0 0.0
        %v850 = vand.u32 %v294, 4294901760
        %v851 = vsub.f32 %v294, %v850
        %v852 = vand.u32 %v851, 4294901760
        %v853 = vsub.f32 %v851, %v852
        %v854 = vand.u32 %v853, 4294901760
        %855 = vmatpush1.msra.mxu0 %v854
        %v856 = vand.u32 %v232, 4294901760
        %857 = vmatprep.mubr.f32.mxu0 %v856
        %v858 = vand.u32 %v231, 4294901760
        %859 = vmatmul.mubr.f32.gmra.mrb[0].mxu0 %v858
        %v860 = vpop.f32.mrb[0].mxu0
        %v861 = vadd.f32 %v404, %v860
        %v862 = vpop.f32.mrb[0].mxu0
        %v863 = vand.u32 %v234, 4294901760
        %864 = vmatprep.mubr.f32.mxu0 %v863
        %v865 = vand.u32 %v233, 4294901760
        %866 = vmatmul.mubr.f32.gmra.mrb[0].mxu0 %v865
        %v867 = vpop.f32.mrb[0].mxu0
        %v868 = vadd.f32 %v419, %v867
        %v869 = vpop.f32.mrb[0].mxu0
        %v870 = vand.u32 %v236, 4294901760
        %871 = vmatprep.mubr.f32.mxu0 %v870
        %v872 = vand.u32 %v235, 4294901760
        %873 = vmatmul.mubr.f32.gmra.mrb[0].mxu0 %v872
        %v874 = vpop.f32.mrb[0].mxu0
        %v875 = vadd.f32 %v434, %v874
        %v876 = vpop.f32.mrb[0].mxu0
        %v877 = vand.u32 %v238, 4294901760
        %878 = vmatprep.mubr.f32.mxu0 %v877
        %v879 = vand.u32 %v237, 4294901760
        %880 = vmatmul.mubr.f32.gmra.mrb[0].mxu0 %v879
        %v881 = vpop.f32.mrb[0].mxu0
        %v882 = vadd.f32 %v449, %v881
        %v883 = vpop.f32.mrb[0].mxu0
        %v884 = vand.u32 %v240, 4294901760
        %885 = vmatprep.mubr.f32.mxu0 %v884
        %v886 = vand.u32 %v239, 4294901760
        %887 = vmatmul.mubr.f32.gmra.mrb[0].mxu0 %v886
        %v888 = vpop.f32.mrb[0].mxu0
        %v889 = vadd.f32 %v464, %v888
        %v890 = vpop.f32.mrb[0].mxu0
        %v891 = vand.u32 %v242, 4294901760
        %892 = vmatprep.mubr.f32.mxu0 %v891
        %v893 = vand.u32 %v241, 4294901760
        %894 = vmatmul.mubr.f32.gmra.mrb[0].mxu0 %v893
        %v895 = vpop.f32.mrb[0].mxu0
        %v896 = vadd.f32 %v479, %v895
        %v897 = vpop.f32.mrb[0].mxu0
        %v898 = vand.u32 %v244, 4294901760
        %899 = vmatprep.mubr.f32.mxu0 %v898
        %v900 = vand.u32 %v243, 4294901760
        %901 = vmatmul.mubr.f32.gmra.mrb[0].mxu0 %v900
        %v902 = vpop.f32.mrb[0].mxu0
        %v903 = vadd.f32 %v494, %v902
        %v904 = vpop.f32.mrb[0].mxu0
        %v905 = vand.u32 %v246, 4294901760
        %906 = vmatprep.mubr.f32.mxu0 %v905
        %v907 = vand.u32 %v245, 4294901760
        %908 = vmatmul.mubr.f32.gmra.mrb[0].mxu0 %v907
        %v909 = vpop.f32.mrb[0].mxu0
        %v910 = vadd.f32 %v509, %v909
        %v911 = vpop.f32.mrb[0].mxu0
        %v912 = vand.u32 %v248, 4294901760
        %913 = vmatprep.mubr.f32.mxu0 %v912
        %v914 = vand.u32 %v247, 4294901760
        %915 = vmatmul.mubr.f32.gmra.mrb[0].mxu0 %v914
        %v916 = vpop.f32.mrb[0].mxu0
        %v917 = vadd.f32 %v524, %v916
        %v918 = vpop.f32.mrb[0].mxu0
        %v919 = vand.u32 %v250, 4294901760
        %920 = vmatprep.mubr.f32.mxu0 %v919
        %v921 = vand.u32 %v249, 4294901760
        %922 = vmatmul.mubr.f32.gmra.mrb[0].mxu0 %v921
        %v923 = vpop.f32.mrb[0].mxu0
        %v924 = vadd.f32 %v539, %v923
        %v925 = vpop.f32.mrb[0].mxu0
        %v926 = vand.u32 %v252, 4294901760
        %927 = vmatprep.mubr.f32.mxu0 %v926
        %v928 = vand.u32 %v251, 4294901760
        %929 = vmatmul.mubr.f32.gmra.mrb[0].mxu0 %v928
        %v930 = vpop.f32.mrb[0].mxu0
        %v931 = vadd.f32 %v554, %v930
        %v932 = vpop.f32.mrb[0].mxu0
        %v933 = vand.u32 %v254, 4294901760
        %934 = vmatprep.mubr.f32.mxu0 %v933
        %v935 = vand.u32 %v253, 4294901760
        %936 = vmatmul.mubr.f32.gmra.mrb[0].mxu0 %v935
        %v937 = vpop.f32.mrb[0].mxu0
        %v938 = vadd.f32 %v569, %v937
        %v939 = vpop.f32.mrb[0].mxu0
        %v940 = vand.u32 %v256, 4294901760
        %941 = vmatprep.mubr.f32.mxu0 %v940
        %v942 = vand.u32 %v255, 4294901760
        %943 = vmatmul.mubr.f32.gmra.mrb[0].mxu0 %v942
        %v944 = vpop.f32.mrb[0].mxu0
        %v945 = vadd.f32 %v584, %v944
        %v946 = vpop.f32.mrb[0].mxu0
        %v947 = vand.u32 %v258, 4294901760
        %948 = vmatprep.mubr.f32.mxu0 %v947
        %v949 = vand.u32 %v257, 4294901760
        %950 = vmatmul.mubr.f32.gmra.mrb[0].mxu0 %v949
        %v951 = vpop.f32.mrb[0].mxu0
        %v952 = vadd.f32 %v599, %v951
        %v953 = vpop.f32.mrb[0].mxu0
        %v954 = vand.u32 %v260, 4294901760
        %955 = vmatprep.mubr.f32.mxu0 %v954
        %v956 = vand.u32 %v259, 4294901760
        %957 = vmatmul.mubr.f32.gmra.mrb[0].mxu0 %v956
        %v958 = vpop.f32.mrb[0].mxu0
        %v959 = vadd.f32 %v614, %v958
        %v960 = vpop.f32.mrb[0].mxu0
        %v961 = vand.u32 %v262, 4294901760
        %962 = vmatprep.mubr.f32.mxu0 %v961
        %v963 = vand.u32 %v261, 4294901760
        %964 = vmatmul.mubr.f32.gmra.mrb[0].mxu0 %v963
        %v965 = vpop.f32.mrb[0].mxu0
        %v966 = vadd.f32 %v629, %v965
        %v967 = vpop.f32.mrb[0].mxu0
        %968 = vdwg.mxu0
        %969 = vmatprep.subr.mxu0 0.0
        %v970 = vand.u32 %v263, 4294901760
        %v971 = vsub.f32 %v263, %v970
        %972 = vmatpush1.msra.mxu0 %v971
        %973 = vmatprep.subr.mxu0 0.0
        %v974 = vand.u32 %v264, 4294901760
        %v975 = vsub.f32 %v264, %v974
        %976 = vmatpush1.msra.mxu0 %v975
        %977 = vmatprep.subr.mxu0 0.0
        %v978 = vand.u32 %v265, 4294901760
        %v979 = vsub.f32 %v265, %v978
        %980 = vmatpush1.msra.mxu0 %v979
        %981 = vmatprep.subr.mxu0 0.0
        %v982 = vand.u32 %v266, 4294901760
        %v983 = vsub.f32 %v266, %v982
        %984 = vmatpush1.msra.mxu0 %v983
        %985 = vmatprep.subr.mxu0 0.0
        %v986 = vand.u32 %v267, 4294901760
        %v987 = vsub.f32 %v267, %v986
        %988 = vmatpush1.msra.mxu0 %v987
        %989 = vmatprep.subr.mxu0 0.0
        %v990 = vand.u32 %v268, 4294901760
        %v991 = vsub.f32 %v268, %v990
        %992 = vmatpush1.msra.mxu0 %v991
        %993 = vmatprep.subr.mxu0 0.0
        %v994 = vand.u32 %v269, 4294901760
        %v995 = vsub.f32 %v269, %v994
        %996 = vmatpush1.msra.mxu0 %v995
        %997 = vmatprep.subr.mxu0 0.0
        %v998 = vand.u32 %v270, 4294901760
        %v999 = vsub.f32 %v270, %v998
        %1000 = vmatpush1.msra.mxu0 %v999
        %1001 = vmatprep.subr.mxu0 0.0
        %v1002 = vand.u32 %v271, 4294901760
        %v1003 = vsub.f32 %v271, %v1002
        %1004 = vmatpush1.msra.mxu0 %v1003
        %1005 = vmatprep.subr.mxu0 0.0
        %v1006 = vand.u32 %v272, 4294901760
        %v1007 = vsub.f32 %v272, %v1006
        %1008 = vmatpush1.msra.mxu0 %v1007
        %1009 = vmatprep.subr.mxu0 0.0
        %v1010 = vand.u32 %v273, 4294901760
        %v1011 = vsub.f32 %v273, %v1010
        %1012 = vmatpush1.msra.mxu0 %v1011
        %1013 = vmatprep.subr.mxu0 0.0
        %v1014 = vand.u32 %v274, 4294901760
        %v1015 = vsub.f32 %v274, %v1014
        %1016 = vmatpush1.msra.mxu0 %v1015
        %1017 = vmatprep.subr.mxu0 0.0
        %v1018 = vand.u32 %v275, 4294901760
        %v1019 = vsub.f32 %v275, %v1018
        %1020 = vmatpush1.msra.mxu0 %v1019
        %1021 = vmatprep.subr.mxu0 0.0
        %v1022 = vand.u32 %v276, 4294901760
        %v1023 = vsub.f32 %v276, %v1022
        %1024 = vmatpush1.msra.mxu0 %v1023
        %1025 = vmatprep.subr.mxu0 0.0
        %v1026 = vand.u32 %v277, 4294901760
        %v1027 = vsub.f32 %v277, %v1026
        %1028 = vmatpush1.msra.mxu0 %v1027
        %1029 = vmatprep.subr.mxu0 0.0
        %v1030 = vand.u32 %v278, 4294901760
        %v1031 = vsub.f32 %v278, %v1030
        %1032 = vmatpush1.msra.mxu0 %v1031
        %1033 = vmatprep.subr.mxu0 0.0
        %v1034 = vand.u32 %v279, 4294901760
        %v1035 = vsub.f32 %v279, %v1034
        %1036 = vmatpush1.msra.mxu0 %v1035
        %1037 = vmatprep.subr.mxu0 0.0
        %v1038 = vand.u32 %v280, 4294901760
        %v1039 = vsub.f32 %v280, %v1038
        %1040 = vmatpush1.msra.mxu0 %v1039
        %1041 = vmatprep.subr.mxu0 0.0
        %v1042 = vand.u32 %v281, 4294901760
        %v1043 = vsub.f32 %v281, %v1042
        %1044 = vmatpush1.msra.mxu0 %v1043
        %1045 = vmatprep.subr.mxu0 0.0
        %v1046 = vand.u32 %v282, 4294901760
        %v1047 = vsub.f32 %v282, %v1046
        %1048 = vmatpush1.msra.mxu0 %v1047
        %1049 = vmatprep.subr.mxu0 0.0
        %v1050 = vand.u32 %v283, 4294901760
        %v1051 = vsub.f32 %v283, %v1050
        %1052 = vmatpush1.msra.mxu0 %v1051
        %1053 = vmatprep.subr.mxu0 0.0
        %v1054 = vand.u32 %v284, 4294901760
        %v1055 = vsub.f32 %v284, %v1054
        %1056 = vmatpush1.msra.mxu0 %v1055
        %1057 = vmatprep.subr.mxu0 0.0
        %v1058 = vand.u32 %v285, 4294901760
        %v1059 = vsub.f32 %v285, %v1058
        %1060 = vmatpush1.msra.mxu0 %v1059
        %1061 = vmatprep.subr.mxu0 0.0
        %v1062 = vand.u32 %v286, 4294901760
        %v1063 = vsub.f32 %v286, %v1062
        %1064 = vmatpush1.msra.mxu0 %v1063
        %1065 = vmatprep.subr.mxu0 0.0
        %v1066 = vand.u32 %v287, 4294901760
        %v1067 = vsub.f32 %v287, %v1066
        %1068 = vmatpush1.msra.mxu0 %v1067
        %1069 = vmatprep.subr.mxu0 0.0
        %v1070 = vand.u32 %v288, 4294901760
        %v1071 = vsub.f32 %v288, %v1070
        %1072 = vmatpush1.msra.mxu0 %v1071
        %1073 = vmatprep.subr.mxu0 0.0
        %v1074 = vand.u32 %v289, 4294901760
        %v1075 = vsub.f32 %v289, %v1074
        %1076 = vmatpush1.msra.mxu0 %v1075
        %1077 = vmatprep.subr.mxu0 0.0
        %v1078 = vand.u32 %v290, 4294901760
        %v1079 = vsub.f32 %v290, %v1078
        %1080 = vmatpush1.msra.mxu0 %v1079
        %1081 = vmatprep.subr.mxu0 0.0
        %v1082 = vand.u32 %v291, 4294901760
        %v1083 = vsub.f32 %v291, %v1082
        %1084 = vmatpush1.msra.mxu0 %v1083
        %1085 = vmatprep.subr.mxu0 0.0
        %v1086 = vand.u32 %v292, 4294901760
        %v1087 = vsub.f32 %v292, %v1086
        %1088 = vmatpush1.msra.mxu0 %v1087
        %1089 = vmatprep.subr.mxu0 0.0
        %v1090 = vand.u32 %v293, 4294901760
        %v1091 = vsub.f32 %v293, %v1090
        %1092 = vmatpush1.msra.mxu0 %v1091
        %1093 = vmatprep.subr.mxu0 0.0
        %v1094 = vand.u32 %v294, 4294901760
        %v1095 = vsub.f32 %v294, %v1094
        %1096 = vmatpush1.msra.mxu0 %v1095
        %v1097 = vand.u32 %v232, 4294901760
        %v1098 = vsub.f32 %v232, %v1097
        %1099 = vmatprep.mubr.f32.mxu0 %v1098
        %v1100 = vand.u32 %v231, 4294901760
        %v1101 = vsub.f32 %v231, %v1100
        %1102 = vmatmul.mubr.f32.gmra.mrb[0].mxu0 %v1101
        %v1103 = vpop.f32.mrb[0].mxu0
        %v1104 = vadd.f32 %v861, %v1103
        %v1105 = vpop.f32.mrb[0].mxu0
        %v1106 = vand.u32 %v234, 4294901760
        %v1107 = vsub.f32 %v234, %v1106
        %1108 = vmatprep.mubr.f32.mxu0 %v1107
        %v1109 = vand.u32 %v233, 4294901760
        %v1110 = vsub.f32 %v233, %v1109
        %1111 = vmatmul.mubr.f32.gmra.mrb[0].mxu0 %v1110
        %v1112 = vpop.f32.mrb[0].mxu0
        %v1113 = vadd.f32 %v868, %v1112
        %v1114 = vpop.f32.mrb[0].mxu0
        %v1115 = vand.u32 %v236, 4294901760
        %v1116 = vsub.f32 %v236, %v1115
        %1117 = vmatprep.mubr.f32.mxu0 %v1116
        %v1118 = vand.u32 %v235, 4294901760
        %v1119 = vsub.f32 %v235, %v1118
        %1120 = vmatmul.mubr.f32.gmra.mrb[0].mxu0 %v1119
        %v1121 = vpop.f32.mrb[0].mxu0
        %v1122 = vadd.f32 %v875, %v1121
        %v1123 = vpop.f32.mrb[0].mxu0
        %v1124 = vand.u32 %v238, 4294901760
        %v1125 = vsub.f32 %v238, %v1124
        %1126 = vmatprep.mubr.f32.mxu0 %v1125
        %v1127 = vand.u32 %v237, 4294901760
        %v1128 = vsub.f32 %v237, %v1127
        %1129 = vmatmul.mubr.f32.gmra.mrb[0].mxu0 %v1128
        %v1130 = vpop.f32.mrb[0].mxu0
        %v1131 = vadd.f32 %v882, %v1130
        %v1132 = vpop.f32.mrb[0].mxu0
        %v1133 = vand.u32 %v240, 4294901760
        %v1134 = vsub.f32 %v240, %v1133
        %1135 = vmatprep.mubr.f32.mxu0 %v1134
        %v1136 = vand.u32 %v239, 4294901760
        %v1137 = vsub.f32 %v239, %v1136
        %1138 = vmatmul.mubr.f32.gmra.mrb[0].mxu0 %v1137
        %v1139 = vpop.f32.mrb[0].mxu0
        %v1140 = vadd.f32 %v889, %v1139
        %v1141 = vpop.f32.mrb[0].mxu0
        %v1142 = vand.u32 %v242, 4294901760
        %v1143 = vsub.f32 %v242, %v1142
        %1144 = vmatprep.mubr.f32.mxu0 %v1143
        %v1145 = vand.u32 %v241, 4294901760
        %v1146 = vsub.f32 %v241, %v1145
        %1147 = vmatmul.mubr.f32.gmra.mrb[0].mxu0 %v1146
        %v1148 = vpop.f32.mrb[0].mxu0
        %v1149 = vadd.f32 %v896, %v1148
        %v1150 = vpop.f32.mrb[0].mxu0
        %v1151 = vand.u32 %v244, 4294901760
        %v1152 = vsub.f32 %v244, %v1151
        %1153 = vmatprep.mubr.f32.mxu0 %v1152
        %v1154 = vand.u32 %v243, 4294901760
        %v1155 = vsub.f32 %v243, %v1154
        %1156 = vmatmul.mubr.f32.gmra.mrb[0].mxu0 %v1155
        %v1157 = vpop.f32.mrb[0].mxu0
        %v1158 = vadd.f32 %v903, %v1157
        %v1159 = vpop.f32.mrb[0].mxu0
        %v1160 = vand.u32 %v246, 4294901760
        %v1161 = vsub.f32 %v246, %v1160
        %1162 = vmatprep.mubr.f32.mxu0 %v1161
        %v1163 = vand.u32 %v245, 4294901760
        %v1164 = vsub.f32 %v245, %v1163
        %1165 = vmatmul.mubr.f32.gmra.mrb[0].mxu0 %v1164
        %v1166 = vpop.f32.mrb[0].mxu0
        %v1167 = vadd.f32 %v910, %v1166
        %v1168 = vpop.f32.mrb[0].mxu0
        %v1169 = vand.u32 %v248, 4294901760
        %v1170 = vsub.f32 %v248, %v1169
        %1171 = vmatprep.mubr.f32.mxu0 %v1170
        %v1172 = vand.u32 %v247, 4294901760
        %v1173 = vsub.f32 %v247, %v1172
        %1174 = vmatmul.mubr.f32.gmra.mrb[0].mxu0 %v1173
        %v1175 = vpop.f32.mrb[0].mxu0
        %v1176 = vadd.f32 %v917, %v1175
        %v1177 = vpop.f32.mrb[0].mxu0
        %v1178 = vand.u32 %v250, 4294901760
        %v1179 = vsub.f32 %v250, %v1178
        %1180 = vmatprep.mubr.f32.mxu0 %v1179
        %v1181 = vand.u32 %v249, 4294901760
        %v1182 = vsub.f32 %v249, %v1181
        %1183 = vmatmul.mubr.f32.gmra.mrb[0].mxu0 %v1182
        %v1184 = vpop.f32.mrb[0].mxu0
        %v1185 = vadd.f32 %v924, %v1184
        %v1186 = vpop.f32.mrb[0].mxu0
        %v1187 = vand.u32 %v252, 4294901760
        %v1188 = vsub.f32 %v252, %v1187
        %1189 = vmatprep.mubr.f32.mxu0 %v1188
        %v1190 = vand.u32 %v251, 4294901760
        %v1191 = vsub.f32 %v251, %v1190
        %1192 = vmatmul.mubr.f32.gmra.mrb[0].mxu0 %v1191
        %v1193 = vpop.f32.mrb[0].mxu0
        %v1194 = vadd.f32 %v931, %v1193
        %v1195 = vpop.f32.mrb[0].mxu0
        %v1196 = vand.u32 %v254, 4294901760
        %v1197 = vsub.f32 %v254, %v1196
        %1198 = vmatprep.mubr.f32.mxu0 %v1197
        %v1199 = vand.u32 %v253, 4294901760
        %v1200 = vsub.f32 %v253, %v1199
        %1201 = vmatmul.mubr.f32.gmra.mrb[0].mxu0 %v1200
        %v1202 = vpop.f32.mrb[0].mxu0
        %v1203 = vadd.f32 %v938, %v1202
        %v1204 = vpop.f32.mrb[0].mxu0
        %v1205 = vand.u32 %v256, 4294901760
        %v1206 = vsub.f32 %v256, %v1205
        %1207 = vmatprep.mubr.f32.mxu0 %v1206
        %v1208 = vand.u32 %v255, 4294901760
        %v1209 = vsub.f32 %v255, %v1208
        %1210 = vmatmul.mubr.f32.gmra.mrb[0].mxu0 %v1209
        %v1211 = vpop.f32.mrb[0].mxu0
        %v1212 = vadd.f32 %v945, %v1211
        %v1213 = vpop.f32.mrb[0].mxu0
        %v1214 = vand.u32 %v258, 4294901760
        %v1215 = vsub.f32 %v258, %v1214
        %1216 = vmatprep.mubr.f32.mxu0 %v1215
        %v1217 = vand.u32 %v257, 4294901760
        %v1218 = vsub.f32 %v257, %v1217
        %1219 = vmatmul.mubr.f32.gmra.mrb[0].mxu0 %v1218
        %v1220 = vpop.f32.mrb[0].mxu0
        %v1221 = vadd.f32 %v952, %v1220
        %v1222 = vpop.f32.mrb[0].mxu0
        %v1223 = vand.u32 %v260, 4294901760
        %v1224 = vsub.f32 %v260, %v1223
        %1225 = vmatprep.mubr.f32.mxu0 %v1224
        %v1226 = vand.u32 %v259, 4294901760
        %v1227 = vsub.f32 %v259, %v1226
        %1228 = vmatmul.mubr.f32.gmra.mrb[0].mxu0 %v1227
        %v1229 = vpop.f32.mrb[0].mxu0
        %v1230 = vadd.f32 %v959, %v1229
        %v1231 = vpop.f32.mrb[0].mxu0
        %v1232 = vand.u32 %v262, 4294901760
        %v1233 = vsub.f32 %v262, %v1232
        %1234 = vmatprep.mubr.f32.mxu0 %v1233
        %v1235 = vand.u32 %v261, 4294901760
        %v1236 = vsub.f32 %v261, %v1235
        %1237 = vmatmul.mubr.f32.gmra.mrb[0].mxu0 %v1236
        %v1238 = vpop.f32.mrb[0].mxu0
        %v1239 = vadd.f32 %v966, %v1238
        %v1240 = vpop.f32.mrb[0].mxu0
        %1241 = vdwg.mxu0
        %1242 = vmatprep.subr.mxu0 0.0
        %v1243 = vand.u32 %v263, 4294901760
        %1244 = vmatpush1.msra.mxu0 %v1243
        %1245 = vmatprep.subr.mxu0 0.0
        %v1246 = vand.u32 %v264, 4294901760
        %1247 = vmatpush1.msra.mxu0 %v1246
        %1248 = vmatprep.subr.mxu0 0.0
        %v1249 = vand.u32 %v265, 4294901760
        %1250 = vmatpush1.msra.mxu0 %v1249
        %1251 = vmatprep.subr.mxu0 0.0
        %v1252 = vand.u32 %v266, 4294901760
        %1253 = vmatpush1.msra.mxu0 %v1252
        %1254 = vmatprep.subr.mxu0 0.0
        %v1255 = vand.u32 %v267, 4294901760
        %1256 = vmatpush1.msra.mxu0 %v1255
        %1257 = vmatprep.subr.mxu0 0.0
        %v1258 = vand.u32 %v268, 4294901760
        %1259 = vmatpush1.msra.mxu0 %v1258
        %1260 = vmatprep.subr.mxu0 0.0
        %v1261 = vand.u32 %v269, 4294901760
        %1262 = vmatpush1.msra.mxu0 %v1261
        %1263 = vmatprep.subr.mxu0 0.0
        %v1264 = vand.u32 %v270, 4294901760
        %1265 = vmatpush1.msra.mxu0 %v1264
        %1266 = vmatprep.subr.mxu0 0.0
        %v1267 = vand.u32 %v271, 4294901760
        %1268 = vmatpush1.msra.mxu0 %v1267
        %1269 = vmatprep.subr.mxu0 0.0
        %v1270 = vand.u32 %v272, 4294901760
        %1271 = vmatpush1.msra.mxu0 %v1270
        %1272 = vmatprep.subr.mxu0 0.0
        %v1273 = vand.u32 %v273, 4294901760
        %1274 = vmatpush1.msra.mxu0 %v1273
        %1275 = vmatprep.subr.mxu0 0.0
        %v1276 = vand.u32 %v274, 4294901760
        %1277 = vmatpush1.msra.mxu0 %v1276
        %1278 = vmatprep.subr.mxu0 0.0
        %v1279 = vand.u32 %v275, 4294901760
        %1280 = vmatpush1.msra.mxu0 %v1279
        %1281 = vmatprep.subr.mxu0 0.0
        %v1282 = vand.u32 %v276, 4294901760
        %1283 = vmatpush1.msra.mxu0 %v1282
        %1284 = vmatprep.subr.mxu0 0.0
        %v1285 = vand.u32 %v277, 4294901760
        %1286 = vmatpush1.msra.mxu0 %v1285
        %1287 = vmatprep.subr.mxu0 0.0
        %v1288 = vand.u32 %v278, 4294901760
        %1289 = vmatpush1.msra.mxu0 %v1288
        %1290 = vmatprep.subr.mxu0 0.0
        %v1291 = vand.u32 %v279, 4294901760
        %1292 = vmatpush1.msra.mxu0 %v1291
        %1293 = vmatprep.subr.mxu0 0.0
        %v1294 = vand.u32 %v280, 4294901760
        %1295 = vmatpush1.msra.mxu0 %v1294
        %1296 = vmatprep.subr.mxu0 0.0
        %v1297 = vand.u32 %v281, 4294901760
        %1298 = vmatpush1.msra.mxu0 %v1297
        %1299 = vmatprep.subr.mxu0 0.0
        %v1300 = vand.u32 %v282, 4294901760
        %1301 = vmatpush1.msra.mxu0 %v1300
        %1302 = vmatprep.subr.mxu0 0.0
        %v1303 = vand.u32 %v283, 4294901760
        %1304 = vmatpush1.msra.mxu0 %v1303
        %1305 = vmatprep.subr.mxu0 0.0
        %v1306 = vand.u32 %v284, 4294901760
        %1307 = vmatpush1.msra.mxu0 %v1306
        %1308 = vmatprep.subr.mxu0 0.0
        %v1309 = vand.u32 %v285, 4294901760
        %1310 = vmatpush1.msra.mxu0 %v1309
        %1311 = vmatprep.subr.mxu0 0.0
        %v1312 = vand.u32 %v286, 4294901760
        %1313 = vmatpush1.msra.mxu0 %v1312
        %1314 = vmatprep.subr.mxu0 0.0
        %v1315 = vand.u32 %v287, 4294901760
        %1316 = vmatpush1.msra.mxu0 %v1315
        %1317 = vmatprep.subr.mxu0 0.0
        %v1318 = vand.u32 %v288, 4294901760
        %1319 = vmatpush1.msra.mxu0 %v1318
        %1320 = vmatprep.subr.mxu0 0.0
        %v1321 = vand.u32 %v289, 4294901760
        %1322 = vmatpush1.msra.mxu0 %v1321
        %1323 = vmatprep.subr.mxu0 0.0
        %v1324 = vand.u32 %v290, 4294901760
        %1325 = vmatpush1.msra.mxu0 %v1324
        %1326 = vmatprep.subr.mxu0 0.0
        %v1327 = vand.u32 %v291, 4294901760
        %1328 = vmatpush1.msra.mxu0 %v1327
        %1329 = vmatprep.subr.mxu0 0.0
        %v1330 = vand.u32 %v292, 4294901760
        %1331 = vmatpush1.msra.mxu0 %v1330
        %1332 = vmatprep.subr.mxu0 0.0
        %v1333 = vand.u32 %v293, 4294901760
        %1334 = vmatpush1.msra.mxu0 %v1333
        %1335 = vmatprep.subr.mxu0 0.0
        %v1336 = vand.u32 %v294, 4294901760
        %1337 = vmatpush1.msra.mxu0 %v1336
        %v1338 = vand.u32 %v232, 4294901760
        %v1339 = vsub.f32 %v232, %v1338
        %v1340 = vand.u32 %v1339, 4294901760
        %1341 = vmatprep.mubr.f32.mxu0 %v1340
        %v1342 = vand.u32 %v231, 4294901760
        %v1343 = vsub.f32 %v231, %v1342
        %v1344 = vand.u32 %v1343, 4294901760
        %1345 = vmatmul.mubr.f32.gmra.mrb[0].mxu0 %v1344
        %v1346 = vpop.f32.mrb[0].mxu0
        %v1347 = vadd.f32 %v1104, %v1346
        %v1348 = vpop.f32.mrb[0].mxu0
        %v1349 = vand.u32 %v234, 4294901760
        %v1350 = vsub.f32 %v234, %v1349
        %v1351 = vand.u32 %v1350, 4294901760
        %1352 = vmatprep.mubr.f32.mxu0 %v1351
        %v1353 = vand.u32 %v233, 4294901760
        %v1354 = vsub.f32 %v233, %v1353
        %v1355 = vand.u32 %v1354, 4294901760
        %1356 = vmatmul.mubr.f32.gmra.mrb[0].mxu0 %v1355
        %v1357 = vpop.f32.mrb[0].mxu0
        %v1358 = vadd.f32 %v1113, %v1357
        %v1359 = vpop.f32.mrb[0].mxu0
        %v1360 = vand.u32 %v236, 4294901760
        %v1361 = vsub.f32 %v236, %v1360
        %v1362 = vand.u32 %v1361, 4294901760
        %1363 = vmatprep.mubr.f32.mxu0 %v1362
        %v1364 = vand.u32 %v235, 4294901760
        %v1365 = vsub.f32 %v235, %v1364
        %v1366 = vand.u32 %v1365, 4294901760
        %1367 = vmatmul.mubr.f32.gmra.mrb[0].mxu0 %v1366
        %v1368 = vpop.f32.mrb[0].mxu0
        %v1369 = vadd.f32 %v1122, %v1368
        %v1370 = vpop.f32.mrb[0].mxu0
        %v1371 = vand.u32 %v238, 4294901760
        %v1372 = vsub.f32 %v238, %v1371
        %v1373 = vand.u32 %v1372, 4294901760
        %1374 = vmatprep.mubr.f32.mxu0 %v1373
        %v1375 = vand.u32 %v237, 4294901760
        %v1376 = vsub.f32 %v237, %v1375
        %v1377 = vand.u32 %v1376, 4294901760
        %1378 = vmatmul.mubr.f32.gmra.mrb[0].mxu0 %v1377
        %v1379 = vpop.f32.mrb[0].mxu0
        %v1380 = vadd.f32 %v1131, %v1379
        %v1381 = vpop.f32.mrb[0].mxu0
        %v1382 = vand.u32 %v240, 4294901760
        %v1383 = vsub.f32 %v240, %v1382
        %v1384 = vand.u32 %v1383, 4294901760
        %1385 = vmatprep.mubr.f32.mxu0 %v1384
        %v1386 = vand.u32 %v239, 4294901760
        %v1387 = vsub.f32 %v239, %v1386
        %v1388 = vand.u32 %v1387, 4294901760
        %1389 = vmatmul.mubr.f32.gmra.mrb[0].mxu0 %v1388
        %v1390 = vpop.f32.mrb[0].mxu0
        %v1391 = vadd.f32 %v1140, %v1390
        %v1392 = vpop.f32.mrb[0].mxu0
        %v1393 = vand.u32 %v242, 4294901760
        %v1394 = vsub.f32 %v242, %v1393
        %v1395 = vand.u32 %v1394, 4294901760
        %1396 = vmatprep.mubr.f32.mxu0 %v1395
        %v1397 = vand.u32 %v241, 4294901760
        %v1398 = vsub.f32 %v241, %v1397
        %v1399 = vand.u32 %v1398, 4294901760
        %1400 = vmatmul.mubr.f32.gmra.mrb[0].mxu0 %v1399
        %v1401 = vpop.f32.mrb[0].mxu0
        %v1402 = vadd.f32 %v1149, %v1401
        %v1403 = vpop.f32.mrb[0].mxu0
        %v1404 = vand.u32 %v244, 4294901760
        %v1405 = vsub.f32 %v244, %v1404
        %v1406 = vand.u32 %v1405, 4294901760
        %1407 = vmatprep.mubr.f32.mxu0 %v1406
        %v1408 = vand.u32 %v243, 4294901760
        %v1409 = vsub.f32 %v243, %v1408
        %v1410 = vand.u32 %v1409, 4294901760
        %1411 = vmatmul.mubr.f32.gmra.mrb[0].mxu0 %v1410
        %v1412 = vpop.f32.mrb[0].mxu0
        %v1413 = vadd.f32 %v1158, %v1412
        %v1414 = vpop.f32.mrb[0].mxu0
        %v1415 = vand.u32 %v246, 4294901760
        %v1416 = vsub.f32 %v246, %v1415
        %v1417 = vand.u32 %v1416, 4294901760
        %1418 = vmatprep.mubr.f32.mxu0 %v1417
        %v1419 = vand.u32 %v245, 4294901760
        %v1420 = vsub.f32 %v245, %v1419
        %v1421 = vand.u32 %v1420, 4294901760
        %1422 = vmatmul.mubr.f32.gmra.mrb[0].mxu0 %v1421
        %v1423 = vpop.f32.mrb[0].mxu0
        %v1424 = vadd.f32 %v1167, %v1423
        %v1425 = vpop.f32.mrb[0].mxu0
        %v1426 = vand.u32 %v248, 4294901760
        %v1427 = vsub.f32 %v248, %v1426
        %v1428 = vand.u32 %v1427, 4294901760
        %1429 = vmatprep.mubr.f32.mxu0 %v1428
        %v1430 = vand.u32 %v247, 4294901760
        %v1431 = vsub.f32 %v247, %v1430
        %v1432 = vand.u32 %v1431, 4294901760
        %1433 = vmatmul.mubr.f32.gmra.mrb[0].mxu0 %v1432
        %v1434 = vpop.f32.mrb[0].mxu0
        %v1435 = vadd.f32 %v1176, %v1434
        %v1436 = vpop.f32.mrb[0].mxu0
        %v1437 = vand.u32 %v250, 4294901760
        %v1438 = vsub.f32 %v250, %v1437
        %v1439 = vand.u32 %v1438, 4294901760
        %1440 = vmatprep.mubr.f32.mxu0 %v1439
        %v1441 = vand.u32 %v249, 4294901760
        %v1442 = vsub.f32 %v249, %v1441
        %v1443 = vand.u32 %v1442, 4294901760
        %1444 = vmatmul.mubr.f32.gmra.mrb[0].mxu0 %v1443
        %v1445 = vpop.f32.mrb[0].mxu0
        %v1446 = vadd.f32 %v1185, %v1445
        %v1447 = vpop.f32.mrb[0].mxu0
        %v1448 = vand.u32 %v252, 4294901760
        %v1449 = vsub.f32 %v252, %v1448
        %v1450 = vand.u32 %v1449, 4294901760
        %1451 = vmatprep.mubr.f32.mxu0 %v1450
        %v1452 = vand.u32 %v251, 4294901760
        %v1453 = vsub.f32 %v251, %v1452
        %v1454 = vand.u32 %v1453, 4294901760
        %1455 = vmatmul.mubr.f32.gmra.mrb[0].mxu0 %v1454
        %v1456 = vpop.f32.mrb[0].mxu0
        %v1457 = vadd.f32 %v1194, %v1456
        %v1458 = vpop.f32.mrb[0].mxu0
        %v1459 = vand.u32 %v254, 4294901760
        %v1460 = vsub.f32 %v254, %v1459
        %v1461 = vand.u32 %v1460, 4294901760
        %1462 = vmatprep.mubr.f32.mxu0 %v1461
        %v1463 = vand.u32 %v253, 4294901760
        %v1464 = vsub.f32 %v253, %v1463
        %v1465 = vand.u32 %v1464, 4294901760
        %1466 = vmatmul.mubr.f32.gmra.mrb[0].mxu0 %v1465
        %v1467 = vpop.f32.mrb[0].mxu0
        %v1468 = vadd.f32 %v1203, %v1467
        %v1469 = vpop.f32.mrb[0].mxu0
        %v1470 = vand.u32 %v256, 4294901760
        %v1471 = vsub.f32 %v256, %v1470
        %v1472 = vand.u32 %v1471, 4294901760
        %1473 = vmatprep.mubr.f32.mxu0 %v1472
        %v1474 = vand.u32 %v255, 4294901760
        %v1475 = vsub.f32 %v255, %v1474
        %v1476 = vand.u32 %v1475, 4294901760
        %1477 = vmatmul.mubr.f32.gmra.mrb[0].mxu0 %v1476
        %v1478 = vpop.f32.mrb[0].mxu0
        %v1479 = vadd.f32 %v1212, %v1478
        %v1480 = vpop.f32.mrb[0].mxu0
        %v1481 = vand.u32 %v258, 4294901760
        %v1482 = vsub.f32 %v258, %v1481
        %v1483 = vand.u32 %v1482, 4294901760
        %1484 = vmatprep.mubr.f32.mxu0 %v1483
        %v1485 = vand.u32 %v257, 4294901760
        %v1486 = vsub.f32 %v257, %v1485
        %v1487 = vand.u32 %v1486, 4294901760
        %1488 = vmatmul.mubr.f32.gmra.mrb[0].mxu0 %v1487
        %v1489 = vpop.f32.mrb[0].mxu0
        %v1490 = vadd.f32 %v1221, %v1489
        %v1491 = vpop.f32.mrb[0].mxu0
        %v1492 = vand.u32 %v260, 4294901760
        %v1493 = vsub.f32 %v260, %v1492
        %v1494 = vand.u32 %v1493, 4294901760
        %1495 = vmatprep.mubr.f32.mxu0 %v1494
        %v1496 = vand.u32 %v259, 4294901760
        %v1497 = vsub.f32 %v259, %v1496
        %v1498 = vand.u32 %v1497, 4294901760
        %1499 = vmatmul.mubr.f32.gmra.mrb[0].mxu0 %v1498
        %v1500 = vpop.f32.mrb[0].mxu0
        %v1501 = vadd.f32 %v1230, %v1500
        %v1502 = vpop.f32.mrb[0].mxu0
        %v1503 = vand.u32 %v262, 4294901760
        %v1504 = vsub.f32 %v262, %v1503
        %v1505 = vand.u32 %v1504, 4294901760
        %1506 = vmatprep.mubr.f32.mxu0 %v1505
        %v1507 = vand.u32 %v261, 4294901760
        %v1508 = vsub.f32 %v261, %v1507
        %v1509 = vand.u32 %v1508, 4294901760
        %1510 = vmatmul.mubr.f32.gmra.mrb[0].mxu0 %v1509
        %v1511 = vpop.f32.mrb[0].mxu0
        %v1512 = vadd.f32 %v1239, %v1511
        %v1513 = vpop.f32.mrb[0].mxu0
        %1514 = vdwg.mxu0
        %1515 = vmatprep.subr.mxu0 0.0
        %v1516 = vand.u32 %v263, 4294901760
        %v1517 = vsub.f32 %v263, %v1516
        %v1518 = vand.u32 %v1517, 4294901760
        %1519 = vmatpush1.msra.mxu0 %v1518
        %1520 = vmatprep.subr.mxu0 0.0
        %v1521 = vand.u32 %v264, 4294901760
        %v1522 = vsub.f32 %v264, %v1521
        %v1523 = vand.u32 %v1522, 4294901760
        %1524 = vmatpush1.msra.mxu0 %v1523
        %1525 = vmatprep.subr.mxu0 0.0
        %v1526 = vand.u32 %v265, 4294901760
        %v1527 = vsub.f32 %v265, %v1526
        %v1528 = vand.u32 %v1527, 4294901760
        %1529 = vmatpush1.msra.mxu0 %v1528
        %1530 = vmatprep.subr.mxu0 0.0
        %v1531 = vand.u32 %v266, 4294901760
        %v1532 = vsub.f32 %v266, %v1531
        %v1533 = vand.u32 %v1532, 4294901760
        %1534 = vmatpush1.msra.mxu0 %v1533
        %1535 = vmatprep.subr.mxu0 0.0
        %v1536 = vand.u32 %v267, 4294901760
        %v1537 = vsub.f32 %v267, %v1536
        %v1538 = vand.u32 %v1537, 4294901760
        %1539 = vmatpush1.msra.mxu0 %v1538
        %1540 = vmatprep.subr.mxu0 0.0
        %v1541 = vand.u32 %v268, 4294901760
        %v1542 = vsub.f32 %v268, %v1541
        %v1543 = vand.u32 %v1542, 4294901760
        %1544 = vmatpush1.msra.mxu0 %v1543
        %1545 = vmatprep.subr.mxu0 0.0
        %v1546 = vand.u32 %v269, 4294901760
        %v1547 = vsub.f32 %v269, %v1546
        %v1548 = vand.u32 %v1547, 4294901760
        %1549 = vmatpush1.msra.mxu0 %v1548
        %1550 = vmatprep.subr.mxu0 0.0
        %v1551 = vand.u32 %v270, 4294901760
        %v1552 = vsub.f32 %v270, %v1551
        %v1553 = vand.u32 %v1552, 4294901760
        %1554 = vmatpush1.msra.mxu0 %v1553
        %1555 = vmatprep.subr.mxu0 0.0
        %v1556 = vand.u32 %v271, 4294901760
        %v1557 = vsub.f32 %v271, %v1556
        %v1558 = vand.u32 %v1557, 4294901760
        %1559 = vmatpush1.msra.mxu0 %v1558
        %1560 = vmatprep.subr.mxu0 0.0
        %v1561 = vand.u32 %v272, 4294901760
        %v1562 = vsub.f32 %v272, %v1561
        %v1563 = vand.u32 %v1562, 4294901760
        %1564 = vmatpush1.msra.mxu0 %v1563
        %1565 = vmatprep.subr.mxu0 0.0
        %v1566 = vand.u32 %v273, 4294901760
        %v1567 = vsub.f32 %v273, %v1566
        %v1568 = vand.u32 %v1567, 4294901760
        %1569 = vmatpush1.msra.mxu0 %v1568
        %1570 = vmatprep.subr.mxu0 0.0
        %v1571 = vand.u32 %v274, 4294901760
        %v1572 = vsub.f32 %v274, %v1571
        %v1573 = vand.u32 %v1572, 4294901760
        %1574 = vmatpush1.msra.mxu0 %v1573
        %1575 = vmatprep.subr.mxu0 0.0
        %v1576 = vand.u32 %v275, 4294901760
        %v1577 = vsub.f32 %v275, %v1576
        %v1578 = vand.u32 %v1577, 4294901760
        %1579 = vmatpush1.msra.mxu0 %v1578
        %1580 = vmatprep.subr.mxu0 0.0
        %v1581 = vand.u32 %v276, 4294901760
        %v1582 = vsub.f32 %v276, %v1581
        %v1583 = vand.u32 %v1582, 4294901760
        %1584 = vmatpush1.msra.mxu0 %v1583
        %1585 = vmatprep.subr.mxu0 0.0
        %v1586 = vand.u32 %v277, 4294901760
        %v1587 = vsub.f32 %v277, %v1586
        %v1588 = vand.u32 %v1587, 4294901760
        %1589 = vmatpush1.msra.mxu0 %v1588
        %1590 = vmatprep.subr.mxu0 0.0
        %v1591 = vand.u32 %v278, 4294901760
        %v1592 = vsub.f32 %v278, %v1591
        %v1593 = vand.u32 %v1592, 4294901760
        %1594 = vmatpush1.msra.mxu0 %v1593
        %1595 = vmatprep.subr.mxu0 0.0
        %v1596 = vand.u32 %v279, 4294901760
        %v1597 = vsub.f32 %v279, %v1596
        %v1598 = vand.u32 %v1597, 4294901760
        %1599 = vmatpush1.msra.mxu0 %v1598
        %1600 = vmatprep.subr.mxu0 0.0
        %v1601 = vand.u32 %v280, 4294901760
        %v1602 = vsub.f32 %v280, %v1601
        %v1603 = vand.u32 %v1602, 4294901760
        %1604 = vmatpush1.msra.mxu0 %v1603
        %1605 = vmatprep.subr.mxu0 0.0
        %v1606 = vand.u32 %v281, 4294901760
        %v1607 = vsub.f32 %v281, %v1606
        %v1608 = vand.u32 %v1607, 4294901760
        %1609 = vmatpush1.msra.mxu0 %v1608
        %1610 = vmatprep.subr.mxu0 0.0
        %v1611 = vand.u32 %v282, 4294901760
        %v1612 = vsub.f32 %v282, %v1611
        %v1613 = vand.u32 %v1612, 4294901760
        %1614 = vmatpush1.msra.mxu0 %v1613
        %1615 = vmatprep.subr.mxu0 0.0
        %v1616 = vand.u32 %v283, 4294901760
        %v1617 = vsub.f32 %v283, %v1616
        %v1618 = vand.u32 %v1617, 4294901760
        %1619 = vmatpush1.msra.mxu0 %v1618
        %1620 = vmatprep.subr.mxu0 0.0
        %v1621 = vand.u32 %v284, 4294901760
        %v1622 = vsub.f32 %v284, %v1621
        %v1623 = vand.u32 %v1622, 4294901760
        %1624 = vmatpush1.msra.mxu0 %v1623
        %1625 = vmatprep.subr.mxu0 0.0
        %v1626 = vand.u32 %v285, 4294901760
        %v1627 = vsub.f32 %v285, %v1626
        %v1628 = vand.u32 %v1627, 4294901760
        %1629 = vmatpush1.msra.mxu0 %v1628
        %1630 = vmatprep.subr.mxu0 0.0
        %v1631 = vand.u32 %v286, 4294901760
        %v1632 = vsub.f32 %v286, %v1631
        %v1633 = vand.u32 %v1632, 4294901760
        %1634 = vmatpush1.msra.mxu0 %v1633
        %1635 = vmatprep.subr.mxu0 0.0
        %v1636 = vand.u32 %v287, 4294901760
        %v1637 = vsub.f32 %v287, %v1636
        %v1638 = vand.u32 %v1637, 4294901760
        %1639 = vmatpush1.msra.mxu0 %v1638
        %1640 = vmatprep.subr.mxu0 0.0
        %v1641 = vand.u32 %v288, 4294901760
        %v1642 = vsub.f32 %v288, %v1641
        %v1643 = vand.u32 %v1642, 4294901760
        %1644 = vmatpush1.msra.mxu0 %v1643
        %1645 = vmatprep.subr.mxu0 0.0
        %v1646 = vand.u32 %v289, 4294901760
        %v1647 = vsub.f32 %v289, %v1646
        %v1648 = vand.u32 %v1647, 4294901760
        %1649 = vmatpush1.msra.mxu0 %v1648
        %1650 = vmatprep.subr.mxu0 0.0
        %v1651 = vand.u32 %v290, 4294901760
        %v1652 = vsub.f32 %v290, %v1651
        %v1653 = vand.u32 %v1652, 4294901760
        %1654 = vmatpush1.msra.mxu0 %v1653
        %1655 = vmatprep.subr.mxu0 0.0
        %v1656 = vand.u32 %v291, 4294901760
        %v1657 = vsub.f32 %v291, %v1656
        %v1658 = vand.u32 %v1657, 4294901760
        %1659 = vmatpush1.msra.mxu0 %v1658
        %1660 = vmatprep.subr.mxu0 0.0
        %v1661 = vand.u32 %v292, 4294901760
        %v1662 = vsub.f32 %v292, %v1661
        %v1663 = vand.u32 %v1662, 4294901760
        %1664 = vmatpush1.msra.mxu0 %v1663
        %1665 = vmatprep.subr.mxu0 0.0
        %v1666 = vand.u32 %v293, 4294901760
        %v1667 = vsub.f32 %v293, %v1666
        %v1668 = vand.u32 %v1667, 4294901760
        %1669 = vmatpush1.msra.mxu0 %v1668
        %1670 = vmatprep.subr.mxu0 0.0
        %v1671 = vand.u32 %v294, 4294901760
        %v1672 = vsub.f32 %v294, %v1671
        %v1673 = vand.u32 %v1672, 4294901760
        %1674 = vmatpush1.msra.mxu0 %v1673
        %v1675 = vand.u32 %v232, 4294901760
        %1676 = vmatprep.mubr.f32.mxu0 %v1675
        %v1677 = vand.u32 %v231, 4294901760
        %1678 = vmatmul.mubr.f32.gmra.mrb[0].mxu0 %v1677
        %v1679 = vpop.f32.mrb[0].mxu0
        %v1680 = vadd.f32 %v1347, %v1679
        %v1681 = vpop.f32.mrb[0].mxu0
        %v1682 = vand.u32 %v234, 4294901760
        %1683 = vmatprep.mubr.f32.mxu0 %v1682
        %v1684 = vand.u32 %v233, 4294901760
        %1685 = vmatmul.mubr.f32.gmra.mrb[0].mxu0 %v1684
        %v1686 = vpop.f32.mrb[0].mxu0
        %v1687 = vadd.f32 %v1358, %v1686
        %v1688 = vpop.f32.mrb[0].mxu0
        %v1689 = vand.u32 %v236, 4294901760
        %1690 = vmatprep.mubr.f32.mxu0 %v1689
        %v1691 = vand.u32 %v235, 4294901760
        %1692 = vmatmul.mubr.f32.gmra.mrb[0].mxu0 %v1691
        %v1693 = vpop.f32.mrb[0].mxu0
        %v1694 = vadd.f32 %v1369, %v1693
        %v1695 = vpop.f32.mrb[0].mxu0
        %v1696 = vand.u32 %v238, 4294901760
        %1697 = vmatprep.mubr.f32.mxu0 %v1696
        %v1698 = vand.u32 %v237, 4294901760
        %1699 = vmatmul.mubr.f32.gmra.mrb[0].mxu0 %v1698
        %v1700 = vpop.f32.mrb[0].mxu0
        %v1701 = vadd.f32 %v1380, %v1700
        %v1702 = vpop.f32.mrb[0].mxu0
        %v1703 = vand.u32 %v240, 4294901760
        %1704 = vmatprep.mubr.f32.mxu0 %v1703
        %v1705 = vand.u32 %v239, 4294901760
        %1706 = vmatmul.mubr.f32.gmra.mrb[0].mxu0 %v1705
        %v1707 = vpop.f32.mrb[0].mxu0
        %v1708 = vadd.f32 %v1391, %v1707
        %v1709 = vpop.f32.mrb[0].mxu0
        %v1710 = vand.u32 %v242, 4294901760
        %1711 = vmatprep.mubr.f32.mxu0 %v1710
        %v1712 = vand.u32 %v241, 4294901760
        %1713 = vmatmul.mubr.f32.gmra.mrb[0].mxu0 %v1712
        %v1714 = vpop.f32.mrb[0].mxu0
        %v1715 = vadd.f32 %v1402, %v1714
        %v1716 = vpop.f32.mrb[0].mxu0
        %v1717 = vand.u32 %v244, 4294901760
        %1718 = vmatprep.mubr.f32.mxu0 %v1717
        %v1719 = vand.u32 %v243, 4294901760
        %1720 = vmatmul.mubr.f32.gmra.mrb[0].mxu0 %v1719
        %v1721 = vpop.f32.mrb[0].mxu0
        %v1722 = vadd.f32 %v1413, %v1721
        %v1723 = vpop.f32.mrb[0].mxu0
        %v1724 = vand.u32 %v246, 4294901760
        %1725 = vmatprep.mubr.f32.mxu0 %v1724
        %v1726 = vand.u32 %v245, 4294901760
        %1727 = vmatmul.mubr.f32.gmra.mrb[0].mxu0 %v1726
        %v1728 = vpop.f32.mrb[0].mxu0
        %v1729 = vadd.f32 %v1424, %v1728
        %v1730 = vpop.f32.mrb[0].mxu0
        %v1731 = vand.u32 %v248, 4294901760
        %1732 = vmatprep.mubr.f32.mxu0 %v1731
        %v1733 = vand.u32 %v247, 4294901760
        %1734 = vmatmul.mubr.f32.gmra.mrb[0].mxu0 %v1733
        %v1735 = vpop.f32.mrb[0].mxu0
        %v1736 = vadd.f32 %v1435, %v1735
        %v1737 = vpop.f32.mrb[0].mxu0
        %v1738 = vand.u32 %v250, 4294901760
        %1739 = vmatprep.mubr.f32.mxu0 %v1738
        %v1740 = vand.u32 %v249, 4294901760
        %1741 = vmatmul.mubr.f32.gmra.mrb[0].mxu0 %v1740
        %v1742 = vpop.f32.mrb[0].mxu0
        %v1743 = vadd.f32 %v1446, %v1742
        %v1744 = vpop.f32.mrb[0].mxu0
        %v1745 = vand.u32 %v252, 4294901760
        %1746 = vmatprep.mubr.f32.mxu0 %v1745
        %v1747 = vand.u32 %v251, 4294901760
        %1748 = vmatmul.mubr.f32.gmra.mrb[0].mxu0 %v1747
        %v1749 = vpop.f32.mrb[0].mxu0
        %v1750 = vadd.f32 %v1457, %v1749
        %v1751 = vpop.f32.mrb[0].mxu0
        %v1752 = vand.u32 %v254, 4294901760
        %1753 = vmatprep.mubr.f32.mxu0 %v1752
        %v1754 = vand.u32 %v253, 4294901760
        %1755 = vmatmul.mubr.f32.gmra.mrb[0].mxu0 %v1754
        %v1756 = vpop.f32.mrb[0].mxu0
        %v1757 = vadd.f32 %v1468, %v1756
        %v1758 = vpop.f32.mrb[0].mxu0
        %v1759 = vand.u32 %v256, 4294901760
        %1760 = vmatprep.mubr.f32.mxu0 %v1759
        %v1761 = vand.u32 %v255, 4294901760
        %1762 = vmatmul.mubr.f32.gmra.mrb[0].mxu0 %v1761
        %v1763 = vpop.f32.mrb[0].mxu0
        %v1764 = vadd.f32 %v1479, %v1763
        %v1765 = vpop.f32.mrb[0].mxu0
        %v1766 = vand.u32 %v258, 4294901760
        %1767 = vmatprep.mubr.f32.mxu0 %v1766
        %v1768 = vand.u32 %v257, 4294901760
        %1769 = vmatmul.mubr.f32.gmra.mrb[0].mxu0 %v1768
        %v1770 = vpop.f32.mrb[0].mxu0
        %v1771 = vadd.f32 %v1490, %v1770
        %v1772 = vpop.f32.mrb[0].mxu0
        %v1773 = vand.u32 %v260, 4294901760
        %1774 = vmatprep.mubr.f32.mxu0 %v1773
        %v1775 = vand.u32 %v259, 4294901760
        %1776 = vmatmul.mubr.f32.gmra.mrb[0].mxu0 %v1775
        %v1777 = vpop.f32.mrb[0].mxu0
        %v1778 = vadd.f32 %v1501, %v1777
        %v1779 = vpop.f32.mrb[0].mxu0
        %v1780 = vand.u32 %v262, 4294901760
        %1781 = vmatprep.mubr.f32.mxu0 %v1780
        %v1782 = vand.u32 %v261, 4294901760
        %1783 = vmatmul.mubr.f32.gmra.mrb[0].mxu0 %v1782
        %v1784 = vpop.f32.mrb[0].mxu0
        %v1785 = vadd.f32 %v1512, %v1784
        %v1786 = vpop.f32.mrb[0].mxu0
        %1787 = vdwg.mxu0
        %1788 = vmatprep.subr.mxu0 0.0
        %v1789 = vand.u32 %v263, 4294901760
        %1790 = vmatpush1.msra.mxu0 %v1789
        %1791 = vmatprep.subr.mxu0 0.0
        %v1792 = vand.u32 %v264, 4294901760
        %1793 = vmatpush1.msra.mxu0 %v1792
        %1794 = vmatprep.subr.mxu0 0.0
        %v1795 = vand.u32 %v265, 4294901760
        %1796 = vmatpush1.msra.mxu0 %v1795
        %1797 = vmatprep.subr.mxu0 0.0
        %v1798 = vand.u32 %v266, 4294901760
        %1799 = vmatpush1.msra.mxu0 %v1798
        %1800 = vmatprep.subr.mxu0 0.0
        %v1801 = vand.u32 %v267, 4294901760
        %1802 = vmatpush1.msra.mxu0 %v1801
        %1803 = vmatprep.subr.mxu0 0.0
        %v1804 = vand.u32 %v268, 4294901760
        %1805 = vmatpush1.msra.mxu0 %v1804
        %1806 = vmatprep.subr.mxu0 0.0
        %v1807 = vand.u32 %v269, 4294901760
        %1808 = vmatpush1.msra.mxu0 %v1807
        %1809 = vmatprep.subr.mxu0 0.0
        %v1810 = vand.u32 %v270, 4294901760
        %1811 = vmatpush1.msra.mxu0 %v1810
        %1812 = vmatprep.subr.mxu0 0.0
        %v1813 = vand.u32 %v271, 4294901760
        %1814 = vmatpush1.msra.mxu0 %v1813
        %1815 = vmatprep.subr.mxu0 0.0
        %v1816 = vand.u32 %v272, 4294901760
        %1817 = vmatpush1.msra.mxu0 %v1816
        %1818 = vmatprep.subr.mxu0 0.0
        %v1819 = vand.u32 %v273, 4294901760
        %1820 = vmatpush1.msra.mxu0 %v1819
        %1821 = vmatprep.subr.mxu0 0.0
        %v1822 = vand.u32 %v274, 4294901760
        %1823 = vmatpush1.msra.mxu0 %v1822
        %1824 = vmatprep.subr.mxu0 0.0
        %v1825 = vand.u32 %v275, 4294901760
        %1826 = vmatpush1.msra.mxu0 %v1825
        %1827 = vmatprep.subr.mxu0 0.0
        %v1828 = vand.u32 %v276, 4294901760
        %1829 = vmatpush1.msra.mxu0 %v1828
        %1830 = vmatprep.subr.mxu0 0.0
        %v1831 = vand.u32 %v277, 4294901760
        %1832 = vmatpush1.msra.mxu0 %v1831
        %1833 = vmatprep.subr.mxu0 0.0
        %v1834 = vand.u32 %v278, 4294901760
        %1835 = vmatpush1.msra.mxu0 %v1834
        %1836 = vmatprep.subr.mxu0 0.0
        %v1837 = vand.u32 %v279, 4294901760
        %1838 = vmatpush1.msra.mxu0 %v1837
        %1839 = vmatprep.subr.mxu0 0.0
        %v1840 = vand.u32 %v280, 4294901760
        %1841 = vmatpush1.msra.mxu0 %v1840
        %1842 = vmatprep.subr.mxu0 0.0
        %v1843 = vand.u32 %v281, 4294901760
        %1844 = vmatpush1.msra.mxu0 %v1843
        %1845 = vmatprep.subr.mxu0 0.0
        %v1846 = vand.u32 %v282, 4294901760
        %1847 = vmatpush1.msra.mxu0 %v1846
        %1848 = vmatprep.subr.mxu0 0.0
        %v1849 = vand.u32 %v283, 4294901760
        %1850 = vmatpush1.msra.mxu0 %v1849
        %1851 = vmatprep.subr.mxu0 0.0
        %v1852 = vand.u32 %v284, 4294901760
        %1853 = vmatpush1.msra.mxu0 %v1852
        %1854 = vmatprep.subr.mxu0 0.0
        %v1855 = vand.u32 %v285, 4294901760
        %1856 = vmatpush1.msra.mxu0 %v1855
        %1857 = vmatprep.subr.mxu0 0.0
        %v1858 = vand.u32 %v286, 4294901760
        %1859 = vmatpush1.msra.mxu0 %v1858
        %1860 = vmatprep.subr.mxu0 0.0
        %v1861 = vand.u32 %v287, 4294901760
        %1862 = vmatpush1.msra.mxu0 %v1861
        %1863 = vmatprep.subr.mxu0 0.0
        %v1864 = vand.u32 %v288, 4294901760
        %1865 = vmatpush1.msra.mxu0 %v1864
        %1866 = vmatprep.subr.mxu0 0.0
        %v1867 = vand.u32 %v289, 4294901760
        %1868 = vmatpush1.msra.mxu0 %v1867
        %1869 = vmatprep.subr.mxu0 0.0
        %v1870 = vand.u32 %v290, 4294901760
        %1871 = vmatpush1.msra.mxu0 %v1870
        %1872 = vmatprep.subr.mxu0 0.0
        %v1873 = vand.u32 %v291, 4294901760
        %1874 = vmatpush1.msra.mxu0 %v1873
        %1875 = vmatprep.subr.mxu0 0.0
        %v1876 = vand.u32 %v292, 4294901760
        %1877 = vmatpush1.msra.mxu0 %v1876
        %1878 = vmatprep.subr.mxu0 0.0
        %v1879 = vand.u32 %v293, 4294901760
        %1880 = vmatpush1.msra.mxu0 %v1879
        %1881 = vmatprep.subr.mxu0 0.0
        %v1882 = vand.u32 %v294, 4294901760
        %1883 = vmatpush1.msra.mxu0 %v1882
        %v1884 = vand.u32 %v232, 4294901760
        %1885 = vmatprep.mubr.f32.mxu0 %v1884
        %v1886 = vand.u32 %v231, 4294901760
        %1887 = vmatmul.mubr.f32.gmra.mrb[0].mxu0 %v1886
        %v1888 = vpop.f32.mrb[0].mxu0
        %v1889 = vadd.f32 %v1680, %v1888
        %v1890 = vpop.f32.mrb[0].mxu0
        %v1891 = vand.u32 %v234, 4294901760
        %1892 = vmatprep.mubr.f32.mxu0 %v1891
        %v1893 = vand.u32 %v233, 4294901760
        %1894 = vmatmul.mubr.f32.gmra.mrb[0].mxu0 %v1893
        %v1895 = vpop.f32.mrb[0].mxu0
        %v1896 = vadd.f32 %v1687, %v1895
        %v1897 = vpop.f32.mrb[0].mxu0
        %v1898 = vand.u32 %v236, 4294901760
        %1899 = vmatprep.mubr.f32.mxu0 %v1898
        %v1900 = vand.u32 %v235, 4294901760
        %1901 = vmatmul.mubr.f32.gmra.mrb[0].mxu0 %v1900
        %v1902 = vpop.f32.mrb[0].mxu0
        %v1903 = vadd.f32 %v1694, %v1902
        %v1904 = vpop.f32.mrb[0].mxu0
        %v1905 = vand.u32 %v238, 4294901760
        %1906 = vmatprep.mubr.f32.mxu0 %v1905
        %v1907 = vand.u32 %v237, 4294901760
        %1908 = vmatmul.mubr.f32.gmra.mrb[0].mxu0 %v1907
        %v1909 = vpop.f32.mrb[0].mxu0
        %v1910 = vadd.f32 %v1701, %v1909
        %v1911 = vpop.f32.mrb[0].mxu0
        %v1912 = vand.u32 %v240, 4294901760
        %1913 = vmatprep.mubr.f32.mxu0 %v1912
        %v1914 = vand.u32 %v239, 4294901760
        %1915 = vmatmul.mubr.f32.gmra.mrb[0].mxu0 %v1914
        %v1916 = vpop.f32.mrb[0].mxu0
        %v1917 = vadd.f32 %v1708, %v1916
        %v1918 = vpop.f32.mrb[0].mxu0
        %v1919 = vand.u32 %v242, 4294901760
        %1920 = vmatprep.mubr.f32.mxu0 %v1919
        %v1921 = vand.u32 %v241, 4294901760
        %1922 = vmatmul.mubr.f32.gmra.mrb[0].mxu0 %v1921
        %v1923 = vpop.f32.mrb[0].mxu0
        %v1924 = vadd.f32 %v1715, %v1923
        %v1925 = vpop.f32.mrb[0].mxu0
        %v1926 = vand.u32 %v244, 4294901760
        %1927 = vmatprep.mubr.f32.mxu0 %v1926
        %v1928 = vand.u32 %v243, 4294901760
        %1929 = vmatmul.mubr.f32.gmra.mrb[0].mxu0 %v1928
        %v1930 = vpop.f32.mrb[0].mxu0
        %v1931 = vadd.f32 %v1722, %v1930
        %v1932 = vpop.f32.mrb[0].mxu0
        %v1933 = vand.u32 %v246, 4294901760
        %1934 = vmatprep.mubr.f32.mxu0 %v1933
        %v1935 = vand.u32 %v245, 4294901760
        %1936 = vmatmul.mubr.f32.gmra.mrb[0].mxu0 %v1935
        %v1937 = vpop.f32.mrb[0].mxu0
        %v1938 = vadd.f32 %v1729, %v1937
        %v1939 = vpop.f32.mrb[0].mxu0
        %v1940 = vand.u32 %v248, 4294901760
        %1941 = vmatprep.mubr.f32.mxu0 %v1940
        %v1942 = vand.u32 %v247, 4294901760
        %1943 = vmatmul.mubr.f32.gmra.mrb[0].mxu0 %v1942
        %v1944 = vpop.f32.mrb[0].mxu0
        %v1945 = vadd.f32 %v1736, %v1944
        %v1946 = vpop.f32.mrb[0].mxu0
        %v1947 = vand.u32 %v250, 4294901760
        %1948 = vmatprep.mubr.f32.mxu0 %v1947
        %v1949 = vand.u32 %v249, 4294901760
        %1950 = vmatmul.mubr.f32.gmra.mrb[0].mxu0 %v1949
        %v1951 = vpop.f32.mrb[0].mxu0
        %v1952 = vadd.f32 %v1743, %v1951
        %v1953 = vpop.f32.mrb[0].mxu0
        %v1954 = vand.u32 %v252, 4294901760
        %1955 = vmatprep.mubr.f32.mxu0 %v1954
        %v1956 = vand.u32 %v251, 4294901760
        %1957 = vmatmul.mubr.f32.gmra.mrb[0].mxu0 %v1956
        %v1958 = vpop.f32.mrb[0].mxu0
        %v1959 = vadd.f32 %v1750, %v1958
        %v1960 = vpop.f32.mrb[0].mxu0
        %v1961 = vand.u32 %v254, 4294901760
        %1962 = vmatprep.mubr.f32.mxu0 %v1961
        %v1963 = vand.u32 %v253, 4294901760
        %1964 = vmatmul.mubr.f32.gmra.mrb[0].mxu0 %v1963
        %v1965 = vpop.f32.mrb[0].mxu0
        %v1966 = vadd.f32 %v1757, %v1965
        %v1967 = vpop.f32.mrb[0].mxu0
        %v1968 = vand.u32 %v256, 4294901760
        %1969 = vmatprep.mubr.f32.mxu0 %v1968
        %v1970 = vand.u32 %v255, 4294901760
        %1971 = vmatmul.mubr.f32.gmra.mrb[0].mxu0 %v1970
        %v1972 = vpop.f32.mrb[0].mxu0
        %v1973 = vadd.f32 %v1764, %v1972
        %v1974 = vpop.f32.mrb[0].mxu0
        %v1975 = vand.u32 %v258, 4294901760
        %1976 = vmatprep.mubr.f32.mxu0 %v1975
        %v1977 = vand.u32 %v257, 4294901760
        %1978 = vmatmul.mubr.f32.gmra.mrb[0].mxu0 %v1977
        %v1979 = vpop.f32.mrb[0].mxu0
        %v1980 = vadd.f32 %v1771, %v1979
        %v1981 = vpop.f32.mrb[0].mxu0
        %v1982 = vand.u32 %v260, 4294901760
        %1983 = vmatprep.mubr.f32.mxu0 %v1982
        %v1984 = vand.u32 %v259, 4294901760
        %1985 = vmatmul.mubr.f32.gmra.mrb[0].mxu0 %v1984
        %v1986 = vpop.f32.mrb[0].mxu0
        %v1987 = vadd.f32 %v1778, %v1986
        %v1988 = vpop.f32.mrb[0].mxu0
        %v1989 = vand.u32 %v262, 4294901760
        %1990 = vmatprep.mubr.f32.mxu0 %v1989
        %v1991 = vand.u32 %v261, 4294901760
        %1992 = vmatmul.mubr.f32.gmra.mrb[0].mxu0 %v1991
        %v1993 = vpop.f32.mrb[0].mxu0
        %v1994 = vadd.f32 %v1785, %v1993
        %v1995 = vpop.f32.mrb[0].mxu0
        %1996 = vdwg.mxu0
        %1997 = vst [vmem:[%s195] sm:$0xff] %v1889
        %1998 = vst [vmem:[%s195 + $0x8] sm:$0xff] %v1896
        %1999 = vst [vmem:[%s195 + $0x10] sm:$0xff] %v1903
        %2000 = vst [vmem:[%s195 + $0x18] sm:$0xff] %v1910
        %2001 = vst [vmem:[%s195 + $0x20] sm:$0xff] %v1917
        %2002 = vst [vmem:[%s195 + $0x28] sm:$0xff] %v1924
        %2003 = vst [vmem:[%s195 + $0x30] sm:$0xff] %v1931
        %2004 = vst [vmem:[%s195 + $0x38] sm:$0xff] %v1938
        %2005 = vst [vmem:[%s195 + $0x40] sm:$0xff] %v1945
        %2006 = vst [vmem:[%s195 + $0x48] sm:$0xff] %v1952
        %2007 = vst [vmem:[%s195 + $0x50] sm:$0xff] %v1959
        %2008 = vst [vmem:[%s195 + $0x58] sm:$0xff] %v1966
        %2009 = vst [vmem:[%s195 + $0x60] sm:$0xff] %v1973
        %2010 = vst [vmem:[%s195 + $0x68] sm:$0xff] %v1980
        %2011 = vst [vmem:[%s195 + $0x70] sm:$0xff] %v1987
        %2012 = vst [vmem:[%s195 + $0x78] sm:$0xff] %v1994
        %s2013 = sand.u32 %s91, 1
        %s2014 = scalar_lea.sflag [#allocation4], %s2013
        %s2015 = sand.u32 %s91, 1
        %s2016 = smul.addr %s2015, 128
        %s2017 = scalar_lea.vmem [#allocation7], %s2016
        // Predicated region
        $region37: #{tpu_custom_call.1} parent=27 // pred_check
          %p2018 = pneg %p101
        $region38: #{tpu_custom_call.1} parent=27 // pred_check_branch
          %2020 = sbr.rel (%p2018) target = $region40
        $region39: #{tpu_custom_call.1} parent=27 // pred_region
          %s2021 = smul.u32 16, %s24
          %s2023 = ssub.s32 2048, 2048
          %2024 = vsyncadd %s2014, %s2023
          %s2025 = smul.addr %s2021, 2
          %s2026 = sadd.s32 %s25, %s2025
          %s2027 = smul.addr %s2026, 128
          %s2028 = scalar_lea.hbm %s2, %s2027
          %s2029 = sshll.u32 %s2017, 4
          %s2030 = int_to_ptr.vmem [resolvable:$true] %s2029
          %2035 = dma.vmem_to_hbm [thread:$0]  %s2030, 2048, %s2028, %s2014, 128, 256, 8
        $region40: #{tpu_custom_call.1} parent=27 // pred_fallthru
          _
      $region28: #{tpu_custom_call.1} parent=5 // pred_fallthru
        _
      %p2036 = scmp.le.s32.totalorder 2, %s15
      // Predicated region
      $region41: #{tpu_custom_call.1} parent=5 // pred_check
        %p2037 = pneg %p2036
      $region42: #{tpu_custom_call.1} parent=5 // pred_check_branch
        %2039 = sbr.rel (%p2037) target = $region44
      $region43: #{tpu_custom_call.1} parent=5 // pred_region
        %s2040 = ssub.s32 %s15, 2
        // Predicated region
        $region45: #{tpu_custom_call.1} parent=43 // pred_check
          %p2041 = pneg %p107
        $region46: #{tpu_custom_call.1} parent=43 // pred_check_branch
          %2043 = sbr.rel (%p2041) target = $region48
        $region47: #{tpu_custom_call.1} parent=43 // pred_region
          %s2044 = sand.u32 %s92, 1
          %s2045 = scalar_lea.sflag [#allocation4], %s2044
          %s2046 = sand.u32 %s92, 1
          %s2047 = smul.addr %s2046, 128
          %s2048 = scalar_lea.vmem [#allocation7], %s2047
          %2049 = dma.done %s2045, 2048
        $region48: #{tpu_custom_call.1} parent=43 // pred_fallthru
          _
      $region44: #{tpu_custom_call.1} parent=5 // pred_fallthru
        _
    $region6: #{tpu_custom_call.1} parent=1 // loop_footer
      %s19 = sadd.s32 1, %s15
    $region7: #{tpu_custom_call.1} parent=1 // loop_footer_branch
      %14 = sbr.rel target = $region3
    $region8: #{tpu_custom_call.1} parent=1 // loop_exit
      _
    %2050 = vsyncpa [#allocation3], 1
    %s2051 = scalar_lea.sflag [#allocation3], 1
    %2052 = vsyncpa %s2051, 1
    %2053 = vsyncpa [#allocation6], 1
    %s2054 = scalar_lea.sflag [#allocation6], 1
    %2055 = vsyncpa %s2054, 1
    %2056 = vsyncpa [#allocation4], 1
    %s2057 = scalar_lea.sflag [#allocation4], 1
    %2058 = vsyncpa %s2057, 1

</llo_original>
